<compile_context>
chip_gen: v7x
topology: tpu7x:2x2x1
jax: 0.10.0
libtpu: 0.0.40
codegen_flags: <defaults>
</compile_context>

<pallas_src>
import jax
import jax.numpy as jnp
from jax import lax
from jax.experimental import pallas as pl
from jax.experimental.pallas import tpu as pltpu

_LN_EPS = 1e-8
_MIB = 1024 * 1024


def _cdiv(a, b):
    return -(-a // b)


def _round_up(a, b):
    return _cdiv(a, b) * b


def _mlp2_kernel(x_ref, w1_ref, b1_ref, g_ref, beta_ref, w2_ref, b2_ref, o_ref):
    """One (tile_rows, in_dim) row tile -> (tile_rows, out_dim_padded)."""
    x = x_ref[...]                                   # already in MXU dtype

    # fc_1: MXU matmul, f32 accumulation.
    h = jnp.dot(x, w1_ref[...], preferred_element_type=jnp.float32) + b1_ref[...]

    # LayerNorm over hidden dim (eps = 1e-8).  Two-pass variance
    # mean((h - mu)^2) to avoid the cancellation of E[h^2] - E[h]^2.
    mu = jnp.mean(h, axis=-1, keepdims=True)
    hc = h - mu
    var = jnp.mean(hc * hc, axis=-1, keepdims=True)
    hn = hc * lax.rsqrt(var + _LN_EPS) * g_ref[...] + beta_ref[...]

    # ReLU.
    a = jnp.maximum(hn, 0.0)

    # fc_2: MXU matmul, f32 accumulation.
    y = jnp.dot(a.astype(w2_ref.dtype), w2_ref[...],
                preferred_element_type=jnp.float32) + b2_ref[...]

    # Sigmoid (exp + reciprocal land on the EUP slot).
    p = jax.nn.sigmoid(y)

    # Dropout(p=0.5) in eval mode == identity.
    # TODO(synk): train-mode Dropout would need pltpu.prng_seed /
    #             pltpu.prng_random_bits masking; PyTorch's RNG stream cannot
    #             be reproduced exactly anyway.
    o_ref[...] = p.astype(o_ref.dtype)


def _vmem_budget_bytes():
    """Per-TensorCore VMEM capacity with headroom for compiler scratch."""
    try:
        cap = int(pltpu.get_tpu_info().vmem_capacity_bytes)
    except Exception:
        cap = 64 * _MIB                      # conservative (v7x per-TC) fallback
    # Leave ~16 MiB for internal scratch / semaphores / spills:
    #   v7x (64 MiB/TC) -> ~48 MiB, v5e/v6e (128 MiB) -> ~112 MiB.
    return max(cap - 16 * _MIB, 32 * _MIB)


def mlp2layer_forward(x, params, *, tile_rows=None, mxu_dtype=jnp.bfloat16,
                      out_dtype=None):
    """x: (B, S, in_dim) -> (B, S, out_dim).  Eval-mode forward of MLP2Layer."""
    w1, b1, gamma, beta, w2, b2 = params
    B, S, in_dim = x.shape
    hidden_dim = w1.shape[1]
    out_dim = w2.shape[1]
    out_dtype = out_dtype if out_dtype is not None else x.dtype

    N = B * S
    in_bytes = jnp.dtype(mxu_dtype).itemsize
    out_bytes = jnp.dtype(out_dtype).itemsize

    # Lane-dense output stores: pad out_dim up to a multiple of 128 so the
    # out_spec emits unmasked vst; the pad columns are sliced off afterwards.
    out_p = _round_up(out_dim, 128)

    # ---- VMEM budget & tile sizing (generation-aware) ---------------------
    vmem_target = _vmem_budget_bytes()
    # Resident, single-buffered weights + sublane-padded small vectors.
    fixed = ((in_dim * hidden_dim + hidden_dim * out_p) * in_bytes
             + 4 * 8 * _round_up(max(hidden_dim, out_p), 128) * 4)
    # Per-row cost: double-buffered x/out tiles + f32 intermediates.
    per_row = (2 * in_dim * in_bytes + 2 * out_p * out_bytes
               + (3 * hidden_dim + 2 * out_p) * 4)

    if tile_rows is None:
        # Use about half the budget for the row tile; multiple of 256 fills
        # the 256-wide MXU on v6e/v7x (2x128 on v5e); clamp to [256, 2048].
        avail = max(vmem_target // 2 - fixed, 0)
        tile_rows = int(min(max((avail // max(per_row, 1)) // 256 * 256, 256),
                            2048))
    # Never make the tile larger than the (row-padded) problem.
    tile_rows = max(8, min(tile_rows, _round_up(N, 8)))
    # v7x megacore: with dimension_semantics=("parallel",) we want >= 2 grid
    # steps whenever there is enough work so both TensorCores get a share.
    if N > 256 and _cdiv(N, tile_rows) < 2:
        tile_rows = max(256, _round_up(_cdiv(N, 2), 128))

    n_tiles = _cdiv(N, tile_rows)
    Np = n_tiles * tile_rows

    # ---- Operand prep (minimize wrapper-side HBM round-trips) -------------
    # Cast first (halves the pad bytes on the bf16 path), pad rows only if
    # the row count isn't already a multiple of tile_rows.
    x2 = x.reshape(N, in_dim).astype(mxu_dtype)
    if Np != N:
        x2 = jnp.pad(x2, ((0, Np - N), (0, 0)))

    w1c = w1.astype(mxu_dtype)
    w2c = w2.astype(mxu_dtype)
    b2f = b2.astype(jnp.float32)
    if out_p != out_dim:
        w2c = jnp.pad(w2c, ((0, 0), (0, out_p - out_dim)))
        b2f = jnp.pad(b2f, ((0, out_p - out_dim),))
    b1_2 = b1.reshape(1, hidden_dim).astype(jnp.float32)
    g_2 = gamma.reshape(1, hidden_dim).astype(jnp.float32)
    be_2 = beta.reshape(1, hidden_dim).astype(jnp.float32)
    b2_2 = b2f.reshape(1, out_p)

    est = fixed + tile_rows * per_row + _MIB
    vmem_limit = int(min(max(2 * est, 32 * _MIB), vmem_target))
    # TODO(synk): if W1/W2 alone approach vmem_target (very large hidden_dim),
    # add a parallel grid axis over fc_2 output columns (keeping the full
    # hidden row resident for LayerNorm) instead of shrinking tile_rows.

    def resident(shape):  # grid-invariant operand: single VMEM buffer.
        return pl.BlockSpec(shape, lambda i: (0, 0),
                            pipeline_mode=pl.Buffered(1))

    out = pl.pallas_call(
        _mlp2_kernel,
        out_shape=jax.ShapeDtypeStruct((Np, out_p), out_dtype),
        grid_spec=pltpu.PrefetchScalarGridSpec(
            num_scalar_prefetch=0,
            grid=(n_tiles,),
            in_specs=[
                pl.BlockSpec((tile_rows, in_dim), lambda i: (i, 0)),  # x rows
                resident((in_dim, hidden_dim)),                       # W1
                resident((1, hidden_dim)),                            # b1
                resident((1, hidden_dim)),                            # LN gamma
                resident((1, hidden_dim)),                            # LN beta
                resident((hidden_dim, out_p)),                        # W2
                resident((1, out_p)),                                 # b2
            ],
            out_specs=pl.BlockSpec((tile_rows, out_p), lambda i: (i, 0)),
        ),
        compiler_params=pltpu.CompilerParams(
            dimension_semantics=("parallel",),
            vmem_limit_bytes=vmem_limit,
        ),
    )(x2, w1c, b1_2, g_2, be_2, w2c, b2_2)

    if Np != N or out_p != out_dim:
        out = out[:N, :out_dim]
    return out.reshape(B, S, out_dim)


def init_params(key, in_dim, hidden_dim, out_dim):
    """Deterministic synthetic init. Linear weights stored (in, out)."""
    k1, k2, k3, k4 = jax.random.split(key, 4)
    lim1 = 1.0 / jnp.sqrt(in_dim)
    lim2 = 1.0 / jnp.sqrt(hidden_dim)
    w1 = jax.random.uniform(k1, (in_dim, hidden_dim), jnp.float32, -lim1, lim1)
    b1 = jax.random.uniform(k2, (hidden_dim,), jnp.float32, -lim1, lim1)
    w2 = jax.random.uniform(k3, (hidden_dim, out_dim), jnp.float32, -lim2, lim2)
    b2 = jax.random.uniform(k4, (out_dim,), jnp.float32, -lim2, lim2)
    gamma = jnp.ones((hidden_dim,), jnp.float32)   # nn.LayerNorm default
    beta = jnp.zeros((hidden_dim,), jnp.float32)
    return (w1, b1, gamma, beta, w2, b2)


def _reference(x, params):
    """Pure-JAX reference for sanity checking (eval-mode forward)."""
    w1, b1, gamma, beta, w2, b2 = params
    h = x @ w1 + b1
    mu = h.mean(-1, keepdims=True)
    var = ((h - mu) ** 2).mean(-1, keepdims=True)
    hn = (h - mu) / jnp.sqrt(var + _LN_EPS) * gamma + beta
    a = jnp.maximum(hn, 0.0)
    y = a @ w2 + b2
    return jax.nn.sigmoid(y)


if __name__ == "__main__":
    key = jax.random.PRNGKey(0)
    kx, kp, kx2, kp2 = jax.random.split(key, 4)

    # ---- Test 1: lane-dense dims; 512 rows -> 2 grid steps of 256 rows ----
    B, S = 4, 128
    in_dim, hidden_dim, out_dim = 128, 256, 128
    x = jax.random.normal(kx, (B, S, in_dim), jnp.float32)
    params = init_params(kp, in_dim, hidden_dim, out_dim)
    ref = _reference(x, params)

    # f32 MXU path: tight tolerance against the pure-JAX reference.
    out_f32 = jax.block_until_ready(
        mlp2layer_forward(x, params, mxu_dtype=jnp.float32))
    assert out_f32.shape == (B, S, out_dim)
    assert jnp.allclose(out_f32, ref, atol=1e-4, rtol=1e-4), \
        float(jnp.max(jnp.abs(out_f32 - ref)))

    # Default bf16 MXU path (f32 accumulation): loose tolerance.
    out_bf16 = jax.block_until_ready(mlp2layer_forward(x, params))
    assert out_bf16.shape == (B, S, out_dim)
    assert float(jnp.max(jnp.abs(out_bf16 - ref))) < 0.1

    # ---- Test 2: small / ragged shapes exercise row padding, lane padding
    # of out_dim (16 -> 128), and auto tile sizing on a tiny problem. --------
    B2, S2 = 2, 5
    in2, hid2, out2 = 16, 32, 16
    x_s = jax.random.normal(kx2, (B2, S2, in2), jnp.float32)
    params_s = init_params(kp2, in2, hid2, out2)
    out_s = jax.block_until_ready(
        mlp2layer_forward(x_s, params_s, mxu_dtype=jnp.float32))
    ref_s = _reference(x_s, params_s)
    assert out_s.shape == (B2, S2, out2)
    assert jnp.allclose(out_s, ref_s, atol=1e-4, rtol=1e-4), \
        float(jnp.max(jnp.abs(out_s - ref_s)))

    print("KERNEL_OK")
</pallas_src>

<mosaic_0001>
module attributes {stable_mosaic.version = 11 : i64} {
  func.func @_mlp2_kernel(%arg0: i32, %arg1: memref<256x128xf32, #tpu.memory_space<vmem>>, %arg2: memref<128x256xf32, #tpu.memory_space<vmem>>, %arg3: memref<1x256xf32, #tpu.memory_space<vmem>>, %arg4: memref<1x256xf32, #tpu.memory_space<vmem>>, %arg5: memref<1x256xf32, #tpu.memory_space<vmem>>, %arg6: memref<256x128xf32, #tpu.memory_space<vmem>>, %arg7: memref<1x128xf32, #tpu.memory_space<vmem>>, %arg8: memref<256x128xf32, #tpu.memory_space<vmem>>) attributes {dimension_semantics = [#tpu.dimension_semantics<parallel>], iteration_bounds = array<i64: 2>, scalar_prefetch = 0 : i64, scratch_operands = 0 : i64, tpu.core_type = #tpu.core_type<tc>, window_params = [{transform_indices = @transform_0, window_bounds = array<i64: 256, 128>}, {pipeline_mode = #tpu.pipeline_mode<synchronous>, transform_indices = @transform_1, window_bounds = array<i64: 128, 256>}, {pipeline_mode = #tpu.pipeline_mode<synchronous>, transform_indices = @transform_2, window_bounds = array<i64: 1, 256>}, {pipeline_mode = #tpu.pipeline_mode<synchronous>, transform_indices = @transform_3, window_bounds = array<i64: 1, 256>}, {pipeline_mode = #tpu.pipeline_mode<synchronous>, transform_indices = @transform_4, window_bounds = array<i64: 1, 256>}, {pipeline_mode = #tpu.pipeline_mode<synchronous>, transform_indices = @transform_5, window_bounds = array<i64: 256, 128>}, {pipeline_mode = #tpu.pipeline_mode<synchronous>, transform_indices = @transform_6, window_bounds = array<i64: 1, 128>}, {transform_indices = @transform_7, window_bounds = array<i64: 256, 128>}]} {
    %c0 = arith.constant 0 : index
    %c0_0 = arith.constant 0 : index
    %0 = vector.load %arg1[%c0, %c0_0] : memref<256x128xf32, #tpu.memory_space<vmem>>, vector<256x128xf32>
    %c0_1 = arith.constant 0 : index
    %c0_2 = arith.constant 0 : index
    %1 = vector.load %arg2[%c0_1, %c0_2] : memref<128x256xf32, #tpu.memory_space<vmem>>, vector<128x256xf32>
    %cst = arith.constant dense<0.000000e+00> : vector<256x256xf32>
    %2 = tpu.matmul %0, %1, %cst {dimension_numbers = #tpu.dot_dimension_numbers<[1], [0], [0], [1], [0, 0, 1, 1], [], []>} : vector<256x128xf32>, vector<128x256xf32>, vector<256x256xf32> -> vector<256x256xf32>
    %c0_3 = arith.constant 0 : index
    %c0_4 = arith.constant 0 : index
    %3 = vector.load %arg3[%c0_3, %c0_4] : memref<1x256xf32, #tpu.memory_space<vmem>>, vector<1x256xf32>
    %4 = vector.broadcast %3 : vector<1x256xf32> to vector<256x256xf32>
    %5 = arith.addf %2, %4 : vector<256x256xf32>
    %cst_5 = arith.constant dense<0.000000e+00> : vector<256xf32>
    %6 = vector.multi_reduction <add>, %5, %cst_5 [1] : vector<256x256xf32> to vector<256xf32>
    %7 = vector.shape_cast %6 : vector<256xf32> to vector<256x1xf32>
    %cst_6 = arith.constant 2.560000e+02 : f32
    %8 = vector.broadcast %cst_6 : f32 to vector<256x1xf32>
    %9 = arith.divf %7, %8 : vector<256x1xf32>
    %10 = vector.broadcast %9 : vector<256x1xf32> to vector<256x256xf32>
    %11 = arith.subf %5, %10 : vector<256x256xf32>
    %12 = arith.mulf %11, %11 : vector<256x256xf32>
    %cst_7 = arith.constant dense<0.000000e+00> : vector<256xf32>
    %13 = vector.multi_reduction <add>, %12, %cst_7 [1] : vector<256x256xf32> to vector<256xf32>
    %14 = vector.shape_cast %13 : vector<256xf32> to vector<256x1xf32>
    %cst_8 = arith.constant 2.560000e+02 : f32
    %15 = vector.broadcast %cst_8 : f32 to vector<256x1xf32>
    %16 = arith.divf %14, %15 : vector<256x1xf32>
    %cst_9 = arith.constant 9.99999993E-9 : f32
    %17 = vector.broadcast %cst_9 : f32 to vector<256x1xf32>
    %18 = arith.addf %16, %17 : vector<256x1xf32>
    %19 = math.rsqrt %18 : vector<256x1xf32>
    %20 = vector.broadcast %19 : vector<256x1xf32> to vector<256x256xf32>
    %21 = arith.mulf %11, %20 : vector<256x256xf32>
    %c0_10 = arith.constant 0 : index
    %c0_11 = arith.constant 0 : index
    %22 = vector.load %arg4[%c0_10, %c0_11] : memref<1x256xf32, #tpu.memory_space<vmem>>, vector<1x256xf32>
    %23 = vector.broadcast %22 : vector<1x256xf32> to vector<256x256xf32>
    %24 = arith.mulf %21, %23 : vector<256x256xf32>
    %c0_12 = arith.constant 0 : index
    %c0_13 = arith.constant 0 : index
    %25 = vector.load %arg5[%c0_12, %c0_13] : memref<1x256xf32, #tpu.memory_space<vmem>>, vector<1x256xf32>
    %26 = vector.broadcast %25 : vector<1x256xf32> to vector<256x256xf32>
    %27 = arith.addf %24, %26 : vector<256x256xf32>
    %cst_14 = arith.constant 0.000000e+00 : f32
    %28 = vector.broadcast %cst_14 : f32 to vector<256x256xf32>
    %29 = arith.maximumf %27, %28 : vector<256x256xf32>
    %c0_15 = arith.constant 0 : index
    %c0_16 = arith.constant 0 : index
    %30 = vector.load %arg6[%c0_15, %c0_16] : memref<256x128xf32, #tpu.memory_space<vmem>>, vector<256x128xf32>
    %cst_17 = arith.constant dense<0.000000e+00> : vector<256x128xf32>
    %31 = tpu.matmul %29, %30, %cst_17 {dimension_numbers = #tpu.dot_dimension_numbers<[1], [0], [0], [1], [0, 0, 1, 1], [], []>} : vector<256x256xf32>, vector<256x128xf32>, vector<256x128xf32> -> vector<256x128xf32>
    %c0_18 = arith.constant 0 : index
    %c0_19 = arith.constant 0 : index
    %32 = vector.load %arg7[%c0_18, %c0_19] : memref<1x128xf32, #tpu.memory_space<vmem>>, vector<1x128xf32>
    %33 = vector.broadcast %32 : vector<1x128xf32> to vector<256x128xf32>
    %34 = arith.addf %31, %33 : vector<256x128xf32>
    %35 = arith.negf %34 : vector<256x128xf32>
    %36 = math.exp %35 : vector<256x128xf32>
    %cst_20 = arith.constant 1.000000e+00 : f32
    %37 = vector.broadcast %cst_20 : f32 to vector<256x128xf32>
    %38 = arith.addf %37, %36 : vector<256x128xf32>
    %39 = arith.divf %37, %38 : vector<256x128xf32>
    %c0_21 = arith.constant 0 : index
    %c0_22 = arith.constant 0 : index
    %40 = vector.load %arg8[%c0_21, %c0_22] : memref<256x128xf32, #tpu.memory_space<vmem>>, vector<256x128xf32>
    tpu.vector_store %arg8[%c0_21, %c0_22], %39 {strides = array<i32>} : memref<256x128xf32, #tpu.memory_space<vmem>>, vector<256x128xf32>,
    return
  }
  func.func @transform_0(%arg0: i32) -> (i32, i32) {
    %c0_i32 = arith.constant 0 : i32
    %c0_i32_0 = arith.constant 0 : i32
    return %arg0, %c0_i32 : i32, i32
  }
  func.func @transform_1(%arg0: i32) -> (i32, i32) {
    %c0_i32 = arith.constant 0 : i32
    %c0_i32_0 = arith.constant 0 : i32
    %c0_i32_1 = arith.constant 0 : i32
    return %c0_i32, %c0_i32_0 : i32, i32
  }
  func.func @transform_2(%arg0: i32) -> (i32, i32) {
    %c0_i32 = arith.constant 0 : i32
    %c0_i32_0 = arith.constant 0 : i32
    %c0_i32_1 = arith.constant 0 : i32
    return %c0_i32, %c0_i32_0 : i32, i32
  }
  func.func @transform_3(%arg0: i32) -> (i32, i32) {
    %c0_i32 = arith.constant 0 : i32
    %c0_i32_0 = arith.constant 0 : i32
    %c0_i32_1 = arith.constant 0 : i32
    return %c0_i32, %c0_i32_0 : i32, i32
  }
  func.func @transform_4(%arg0: i32) -> (i32, i32) {
    %c0_i32 = arith.constant 0 : i32
    %c0_i32_0 = arith.constant 0 : i32
    %c0_i32_1 = arith.constant 0 : i32
    return %c0_i32, %c0_i32_0 : i32, i32
  }
  func.func @transform_5(%arg0: i32) -> (i32, i32) {
    %c0_i32 = arith.constant 0 : i32
    %c0_i32_0 = arith.constant 0 : i32
    %c0_i32_1 = arith.constant 0 : i32
    return %c0_i32, %c0_i32_0 : i32, i32
  }
  func.func @transform_6(%arg0: i32) -> (i32, i32) {
    %c0_i32 = arith.constant 0 : i32
    %c0_i32_0 = arith.constant 0 : i32
    %c0_i32_1 = arith.constant 0 : i32
    return %c0_i32, %c0_i32_0 : i32, i32
  }
  func.func @transform_7(%arg0: i32) -> (i32, i32) {
    %c0_i32 = arith.constant 0 : i32
    %c0_i32_0 = arith.constant 0 : i32
    return %arg0, %c0_i32 : i32, i32
  }
}

</mosaic_0001>

<llo_original>
// kernel: tpu_custom_call.1
$region0: #{tpu_custom_call.1}
  #allocation0 [shape = 'u32[]', space=smem, size = 0x4, offset = 0x4, fixed_abs, tag = 'smem constant byte address 0x4 - core index']
  #allocation1 [shape = 'u32[144,128]{1,0:T(1,128)}', space=vmem, size = 0x12000, scoped, tag = 'internal scratch']
  %s0 = inlined_call_operand.hbm [shape: f32[512,128], index: 0, kind: input, shape index: {}]
  %s1 = inlined_call_operand.hbm [shape: f32[128,256], index: 1, kind: input, shape index: {}]
  %s2 = inlined_call_operand.vmem [shape: f32[1,256], index: 2, kind: input, shape index: {}]
  %s3 = inlined_call_operand.vmem [shape: f32[1,256], index: 3, kind: input, shape index: {}]
  %s4 = inlined_call_operand.vmem [shape: f32[1,256], index: 4, kind: input, shape index: {}]
  %s5 = inlined_call_operand.hbm [shape: f32[256,128], index: 5, kind: input, shape index: {}]
  %s6 = inlined_call_operand.vmem [shape: f32[1,128], index: 6, kind: input, shape index: {}]
  %s7 = inlined_call_operand.hbm [shape: f32[512,128], index: 7, kind: output, shape index: {}]
  %s8 = sld [smem:[#allocation0]]
  $region73: #{tpu_custom_call.1} parent=0
    _
  %s10 = ssub.s32 1, %s8
  %s11 = scalar_select 0, %s10, %s8
  $region1: #{tpu_custom_call.1} parent=0
    #allocation2 [shape = 'u8[262144]{0}', space=vmem, size = 0x40000, scoped, tag = 'input window, operand 0']
    #allocation3 [shape = 's32[2]{0}', space=sflag, size = 0x8, scoped, tag = 'scoped memory for tpu_custom_call.1']
    #allocation4 [shape = 's32[2]{0}', space=sflag, size = 0x8, scoped, tag = 'scoped memory for tpu_custom_call.1']
    #allocation5 [shape = 'u8[131072]{0}', space=vmem, size = 0x20000, scoped, tag = 'input window, operand 1, single buffered']
    #allocation6 [shape = 's32[1]{0}', space=sflag, size = 0x4, scoped, tag = 'scoped memory for tpu_custom_call.1']
    #allocation7 [shape = 'u8[131072]{0}', space=vmem, size = 0x20000, scoped, tag = 'input window, operand 5, single buffered']
    #allocation8 [shape = 'u8[262144]{0}', space=vmem, size = 0x40000, scoped, tag = 'output window, operand 0']
    %12 = vsyncpa [#allocation3], 0
    %s13 = scalar_lea.sflag [#allocation3], 1
    %14 = vsyncpa %s13, 0
    %15 = vsyncpa [#allocation6], 0
    %16 = vsyncpa [#allocation4], 0
    %s17 = scalar_lea.sflag [#allocation4], 1
    %18 = vsyncpa %s17, 0
    loop: start=0, step=1, limit=4
    $region2: #{tpu_custom_call.1} parent=1 // loop_pre_header
      _
    $region3: #{tpu_custom_call.1} parent=1 // loop_header
      %s20 = sphi 0, %s24
      %p21 = scmp.ge.s32.totalorder %s20, 4
      %s30 = sphi 0, %s32
      %s33 = sphi 0, %s30
      %s34 = sphi 0, %s33
      %s50 = sphi 0, %s34
      %s54 = sphi 0, %s54
      %s56 = sphi 0, %s54
      %s57 = sphi 0, %s56
      %s71 = sphi 0, %s57
      %s75 = sphi 0, %s75
      %s77 = sphi 0, %s75
      %s78 = sphi 0, %s77
      %s92 = sphi 0, %s78
      %s96 = sphi 0, %s96
      %s98 = sphi 0, %s96
      %s99 = sphi 0, %s98
      %s113 = sphi 0, %s99
      %s117 = sphi 0, %s117
      %s119 = sphi 0, %s117
      %s120 = sphi 0, %s119
      %s134 = sphi 0, %s120
      %s138 = sphi 0, %s138
      %s140 = sphi 0, %s138
      %s141 = sphi 0, %s140
      %s155 = sphi 0, %s141
      %s159 = sphi 0, %s159
      %s161 = sphi 0, %s159
      %s162 = sphi 0, %s161
      %s176 = sphi 0, %s162
      %s182 = sphi 0, %s184
      %s185 = sphi 0, %s182
      %s186 = sphi 0, %s185
      %s202 = sphi 0, %s186
    $region4: #{tpu_custom_call.1} parent=1 // loop_header_branch
      %23 = sbr.rel (%p21) target = $region8
    $region5: #{tpu_custom_call.1} parent=1 // loop_body
      %s25 = ssub.s32 %s20, 1
      %s26 = ssub.s32 %s20, 2
      %s27 = sadd.s32 %s20, 1
      %s28 = ssub.s32 %s20, %s27
      %p29 = scmp.eq.s32.totalorder %s28, 0
      %s31 = sadd.s32 %s30, 1
      %s32 = scalar_select %p29, %s30, %s31
      %p35 = pneg %p29
      %p36 = scmp.eq.s32.totalorder %s20, 1
      %p37 = por %p35, %p36
      %p38 = scmp.ne.s32.totalorder %s30, %s33
      %p39 = scmp.eq.s32.totalorder %s20, 0
      %p40 = por %p38, %p39
      %p41 = scmp.ne.s32.totalorder %s30, %s33
      %p42 = scmp.eq.s32.totalorder %s25, 1
      %p43 = por %p41, %p42
      %p44 = scmp.ne.s32.totalorder %s33, %s34
      %p45 = scmp.eq.s32.totalorder %s25, 0
      %p46 = por %p44, %p45
      %p47 = scmp.ne.s32.totalorder %s33, %s34
      %p48 = scmp.eq.s32.totalorder %s26, 1
      %p49 = por %p47, %p48
      %p51 = scmp.ne.s32.totalorder %s34, %s50
      %p52 = scmp.eq.s32.totalorder %s26, 0
      %p53 = por %p51, %p52
      %s55 = sadd.s32 %s54, 1
      %p58 = scmp.eq.s32.totalorder %s20, 1
      %p59 = scmp.ne.s32.totalorder %s54, %s56
      %p60 = scmp.eq.s32.totalorder %s20, 0
      %p61 = por %p59, %p60
      %p62 = scmp.ne.s32.totalorder %s54, %s56
      %p63 = scmp.eq.s32.totalorder %s25, 1
      %p64 = por %p62, %p63
      %p65 = scmp.ne.s32.totalorder %s56, %s57
      %p66 = scmp.eq.s32.totalorder %s25, 0
      %p67 = por %p65, %p66
      %p68 = scmp.ne.s32.totalorder %s56, %s57
      %p69 = scmp.eq.s32.totalorder %s26, 1
      %p70 = por %p68, %p69
      %p72 = scmp.ne.s32.totalorder %s57, %s71
      %p73 = scmp.eq.s32.totalorder %s26, 0
      %p74 = por %p72, %p73
      %s76 = sadd.s32 %s75, 1
      %p79 = scmp.eq.s32.totalorder %s20, 1
      %p80 = scmp.ne.s32.totalorder %s75, %s77
      %p81 = scmp.eq.s32.totalorder %s20, 0
      %p82 = por %p80, %p81
      %p83 = scmp.ne.s32.totalorder %s75, %s77
      %p84 = scmp.eq.s32.totalorder %s25, 1
      %p85 = por %p83, %p84
      %p86 = scmp.ne.s32.totalorder %s77, %s78
      %p87 = scmp.eq.s32.totalorder %s25, 0
      %p88 = por %p86, %p87
      %p89 = scmp.ne.s32.totalorder %s77, %s78
      %p90 = scmp.eq.s32.totalorder %s26, 1
      %p91 = por %p89, %p90
      %p93 = scmp.ne.s32.totalorder %s78, %s92
      %p94 = scmp.eq.s32.totalorder %s26, 0
      %p95 = por %p93, %p94
      %s97 = sadd.s32 %s96, 1
      %p100 = scmp.eq.s32.totalorder %s20, 1
      %p101 = scmp.ne.s32.totalorder %s96, %s98
      %p102 = scmp.eq.s32.totalorder %s20, 0
      %p103 = por %p101, %p102
      %p104 = scmp.ne.s32.totalorder %s96, %s98
      %p105 = scmp.eq.s32.totalorder %s25, 1
      %p106 = por %p104, %p105
      %p107 = scmp.ne.s32.totalorder %s98, %s99
      %p108 = scmp.eq.s32.totalorder %s25, 0
      %p109 = por %p107, %p108
      %p110 = scmp.ne.s32.totalorder %s98, %s99
      %p111 = scmp.eq.s32.totalorder %s26, 1
      %p112 = por %p110, %p111
      %p114 = scmp.ne.s32.totalorder %s99, %s113
      %p115 = scmp.eq.s32.totalorder %s26, 0
      %p116 = por %p114, %p115
      %s118 = sadd.s32 %s117, 1
      %p121 = scmp.eq.s32.totalorder %s20, 1
      %p122 = scmp.ne.s32.totalorder %s117, %s119
      %p123 = scmp.eq.s32.totalorder %s20, 0
      %p124 = por %p122, %p123
      %p125 = scmp.ne.s32.totalorder %s117, %s119
      %p126 = scmp.eq.s32.totalorder %s25, 1
      %p127 = por %p125, %p126
      %p128 = scmp.ne.s32.totalorder %s119, %s120
      %p129 = scmp.eq.s32.totalorder %s25, 0
      %p130 = por %p128, %p129
      %p131 = scmp.ne.s32.totalorder %s119, %s120
      %p132 = scmp.eq.s32.totalorder %s26, 1
      %p133 = por %p131, %p132
      %p135 = scmp.ne.s32.totalorder %s120, %s134
      %p136 = scmp.eq.s32.totalorder %s26, 0
      %p137 = por %p135, %p136
      %s139 = sadd.s32 %s138, 1
      %p142 = scmp.eq.s32.totalorder %s20, 1
      %p143 = scmp.ne.s32.totalorder %s138, %s140
      %p144 = scmp.eq.s32.totalorder %s20, 0
      %p145 = por %p143, %p144
      %p146 = scmp.ne.s32.totalorder %s138, %s140
      %p147 = scmp.eq.s32.totalorder %s25, 1
      %p148 = por %p146, %p147
      %p149 = scmp.ne.s32.totalorder %s140, %s141
      %p150 = scmp.eq.s32.totalorder %s25, 0
      %p151 = por %p149, %p150
      %p152 = scmp.ne.s32.totalorder %s140, %s141
      %p153 = scmp.eq.s32.totalorder %s26, 1
      %p154 = por %p152, %p153
      %p156 = scmp.ne.s32.totalorder %s141, %s155
      %p157 = scmp.eq.s32.totalorder %s26, 0
      %p158 = por %p156, %p157
      %s160 = sadd.s32 %s159, 1
      %p163 = scmp.eq.s32.totalorder %s20, 1
      %p164 = scmp.ne.s32.totalorder %s159, %s161
      %p165 = scmp.eq.s32.totalorder %s20, 0
      %p166 = por %p164, %p165
      %p167 = scmp.ne.s32.totalorder %s159, %s161
      %p168 = scmp.eq.s32.totalorder %s25, 1
      %p169 = por %p167, %p168
      %p170 = scmp.ne.s32.totalorder %s161, %s162
      %p171 = scmp.eq.s32.totalorder %s25, 0
      %p172 = por %p170, %p171
      %p173 = scmp.ne.s32.totalorder %s161, %s162
      %p174 = scmp.eq.s32.totalorder %s26, 1
      %p175 = por %p173, %p174
      %p177 = scmp.ne.s32.totalorder %s162, %s176
      %p178 = scmp.eq.s32.totalorder %s26, 0
      %p179 = por %p177, %p178
      %s180 = ssub.s32 %s20, %s27
      %p181 = scmp.eq.s32.totalorder %s180, 0
      %s183 = sadd.s32 %s182, 1
      %s184 = scalar_select %p181, %s182, %s183
      %p187 = pneg %p181
      %p188 = scmp.eq.s32.totalorder %s20, 1
      %p189 = por %p187, %p188
      %p190 = scmp.ne.s32.totalorder %s182, %s185
      %p191 = scmp.eq.s32.totalorder %s20, 0
      %p192 = por %p190, %p191
      %p193 = scmp.ne.s32.totalorder %s182, %s185
      %p194 = scmp.eq.s32.totalorder %s25, 1
      %p195 = por %p193, %p194
      %p196 = scmp.ne.s32.totalorder %s185, %s186
      %p197 = scmp.eq.s32.totalorder %s25, 0
      %p198 = por %p196, %p197
      %p199 = scmp.ne.s32.totalorder %s185, %s186
      %p200 = scmp.eq.s32.totalorder %s26, 1
      %p201 = por %p199, %p200
      %p203 = scmp.ne.s32.totalorder %s186, %s202
      %p204 = scmp.eq.s32.totalorder %s26, 0
      %p205 = por %p203, %p204
      %p206 = scmp.le.s32.totalorder 1, %s20
      %p207 = scmp.lt.s32.totalorder %s20, 3
      %p208 = pnand %p206, %p207
      %p209 = pneg %p208
      // Predicated region
      $region9: #{tpu_custom_call.1} parent=5 // pred_check
        _
      $region10: #{tpu_custom_call.1} parent=5 // pred_check_branch
        %211 = sbr.rel (%p208) target = $region12
      $region11: #{tpu_custom_call.1} parent=5 // pred_region
        %s212 = ssub.s32 %s20, 1
        // Predicated region
        $region13: #{tpu_custom_call.1} parent=11 // pred_check
          %p213 = pneg %p67
        $region14: #{tpu_custom_call.1} parent=11 // pred_check_branch
          %215 = sbr.rel (%p213) target = $region16
        $region15: #{tpu_custom_call.1} parent=11 // pred_region
          %s217 = ssub.s32 4096, 4096
          %218 = vsyncadd [#allocation6], %s217
          %s219 = sshll.u32 [#allocation5], 4
          %s220 = int_to_ptr.vmem [resolvable:$true] %s219
          %225 = dma.hbm_to_vmem [thread:$0]  %s1, 4096, %s220, [#allocation6], 256, 256, 16
        $region16: #{tpu_custom_call.1} parent=11 // pred_fallthru
          _
        // Predicated region
        $region17: #{tpu_custom_call.1} parent=11 // pred_check
          %p226 = pneg %p88
        $region18: #{tpu_custom_call.1} parent=11 // pred_check_branch
          %228 = sbr.rel (%p226) target = $region20
        $region19: #{tpu_custom_call.1} parent=11 // pred_region
          _
        $region20: #{tpu_custom_call.1} parent=11 // pred_fallthru
          _
        // Predicated region
        $region21: #{tpu_custom_call.1} parent=11 // pred_check
          %p229 = pneg %p109
        $region22: #{tpu_custom_call.1} parent=11 // pred_check_branch
          %231 = sbr.rel (%p229) target = $region24
        $region23: #{tpu_custom_call.1} parent=11 // pred_region
          _
        $region24: #{tpu_custom_call.1} parent=11 // pred_fallthru
          _
        // Predicated region
        $region25: #{tpu_custom_call.1} parent=11 // pred_check
          %p232 = pneg %p130
        $region26: #{tpu_custom_call.1} parent=11 // pred_check_branch
          %234 = sbr.rel (%p232) target = $region28
        $region27: #{tpu_custom_call.1} parent=11 // pred_region
          _
        $region28: #{tpu_custom_call.1} parent=11 // pred_fallthru
          _
        // Predicated region
        $region29: #{tpu_custom_call.1} parent=11 // pred_check
          %p235 = pneg %p151
        $region30: #{tpu_custom_call.1} parent=11 // pred_check_branch
          %237 = sbr.rel (%p235) target = $region32
        $region31: #{tpu_custom_call.1} parent=11 // pred_region
          %s239 = ssub.s32 4096, 4096
          %240 = vsyncadd [#allocation6], %s239
          %s241 = sshll.u32 [#allocation7], 4
          %s242 = int_to_ptr.vmem [resolvable:$true] %s241
          %247 = dma.hbm_to_vmem [thread:$0]  %s5, 4096, %s242, [#allocation6], 128, 128, 8
        $region32: #{tpu_custom_call.1} parent=11 // pred_fallthru
          _
        // Predicated region
        $region33: #{tpu_custom_call.1} parent=11 // pred_check
          %p248 = pneg %p172
        $region34: #{tpu_custom_call.1} parent=11 // pred_check_branch
          %250 = sbr.rel (%p248) target = $region36
        $region35: #{tpu_custom_call.1} parent=11 // pred_region
          _
        $region36: #{tpu_custom_call.1} parent=11 // pred_fallthru
          _
      $region12: #{tpu_custom_call.1} parent=5 // pred_fallthru
        _
      %p251 = scmp.lt.s32.totalorder %s20, 2
      // Predicated region
      $region37: #{tpu_custom_call.1} parent=5 // pred_check
        %p252 = pneg %p251
      $region38: #{tpu_custom_call.1} parent=5 // pred_check_branch
        %254 = sbr.rel (%p252) target = $region40
      $region39: #{tpu_custom_call.1} parent=5 // pred_region
        // Predicated region
        $region41: #{tpu_custom_call.1} parent=39 // pred_check
          %p255 = pneg %p40
        $region42: #{tpu_custom_call.1} parent=39 // pred_check_branch
          %257 = sbr.rel (%p255) target = $region44
        $region43: #{tpu_custom_call.1} parent=39 // pred_region
          %s258 = sand.u32 %s30, 1
          %s259 = scalar_lea.sflag [#allocation3], %s258
          %s260 = sand.u32 %s30, 1
          %s261 = smul.addr %s260, 256
          %s262 = scalar_lea.vmem [#allocation2], %s261
          %s263 = smul.u32 32, %s20
          %s265 = ssub.s32 4096, 4096
          %266 = vsyncadd %s259, %s265
          %s267 = smul.addr %s263, 128
          %s268 = scalar_lea.hbm %s0, %s267
          %s269 = sshll.u32 %s262, 4
          %s270 = int_to_ptr.vmem [resolvable:$true] %s269
          %275 = dma.hbm_to_vmem [thread:$0]  %s268, 4096, %s270, %s259, 128, 128, 8
        $region44: #{tpu_custom_call.1} parent=39 // pred_fallthru
          _
      $region40: #{tpu_custom_call.1} parent=5 // pred_fallthru
        _
      %p276 = scmp.le.s32.totalorder 1, %s20
      %p277 = scmp.lt.s32.totalorder %s20, 3
      %p278 = pnand %p276, %p277
      %p279 = pneg %p278
      // Predicated region
      $region45: #{tpu_custom_call.1} parent=5 // pred_check
        _
      $region46: #{tpu_custom_call.1} parent=5 // pred_check_branch
        %281 = sbr.rel (%p278) target = $region48
      $region47: #{tpu_custom_call.1} parent=5 // pred_region
        %s282 = ssub.s32 %s20, 1
        %s283 = sand.u32 %s33, 1
        %s284 = scalar_lea.sflag [#allocation3], %s283
        %s285 = sand.u32 %s33, 1
        %s286 = smul.addr %s285, 256
        %s287 = scalar_lea.vmem [#allocation2], %s286
        // Predicated region
        $region49: #{tpu_custom_call.1} parent=47 // pred_check
          %p288 = pneg %p46
        $region50: #{tpu_custom_call.1} parent=47 // pred_check_branch
          %290 = sbr.rel (%p288) target = $region52
        $region51: #{tpu_custom_call.1} parent=47 // pred_region
          %291 = dma.done %s284, 4096
        $region52: #{tpu_custom_call.1} parent=47 // pred_fallthru
          _
        // Predicated region
        $region53: #{tpu_custom_call.1} parent=47 // pred_check
          %p292 = pneg %p67
        $region54: #{tpu_custom_call.1} parent=47 // pred_check_branch
          %294 = sbr.rel (%p292) target = $region56
        $region55: #{tpu_custom_call.1} parent=47 // pred_region
          %295 = dma.done [#allocation6], 4096
        $region56: #{tpu_custom_call.1} parent=47 // pred_fallthru
          _
        // Predicated region
        $region57: #{tpu_custom_call.1} parent=47 // pred_check
          %p296 = pneg %p151
        $region58: #{tpu_custom_call.1} parent=47 // pred_check_branch
          %298 = sbr.rel (%p296) target = $region60
        $region59: #{tpu_custom_call.1} parent=47 // pred_region
          %299 = dma.done [#allocation6], 4096
        $region60: #{tpu_custom_call.1} parent=47 // pred_fallthru
          _
        %s300 = sand.u32 %s33, 1
        %s301 = scalar_lea.sflag [#allocation3], %s300
        %s302 = sand.u32 %s33, 1
        %s303 = smul.addr %s302, 256
        %s304 = scalar_lea.vmem [#allocation2], %s303
        %p305 = pneg %p46
        %p306 = pneg %p43
        %p307 = pneg %p67
        %p308 = pneg %p64
        %p309 = pneg %p88
        %p310 = pneg %p85
        %p311 = pneg %p109
        %p312 = pneg %p106
        %p313 = pneg %p130
        %p314 = pneg %p127
        %p315 = pneg %p151
        %p316 = pneg %p148
        %p317 = pneg %p172
        %p318 = pneg %p169
        %p319 = pneg %p198
        %p320 = pneg %p195
        %s321 = sand.u32 %s185, 1
        %s322 = scalar_lea.sflag [#allocation4], %s321
        %s323 = sand.u32 %s185, 1
        %s324 = smul.addr %s323, 256
        %s325 = scalar_lea.vmem [#allocation8], %s324
        %s326 = smul.u32 32, %s25
        %s327 = smul.u32 32, %s25
        %v328 = vld [vmem:[%s287] sm:$0xff]
        %v329 = vld [vmem:[%s287 + $0x8] sm:$0xff]
        %v330 = vld [vmem:[%s287 + $0x10] sm:$0xff]
        %v331 = vld [vmem:[%s287 + $0x18] sm:$0xff]
        %v332 = vld [vmem:[%s287 + $0x20] sm:$0xff]
        %v333 = vld [vmem:[%s287 + $0x28] sm:$0xff]
        %v334 = vld [vmem:[%s287 + $0x30] sm:$0xff]
        %v335 = vld [vmem:[%s287 + $0x38] sm:$0xff]
        %v336 = vld [vmem:[%s287 + $0x40] sm:$0xff]
        %v337 = vld [vmem:[%s287 + $0x48] sm:$0xff]
        %v338 = vld [vmem:[%s287 + $0x50] sm:$0xff]
        %v339 = vld [vmem:[%s287 + $0x58] sm:$0xff]
        %v340 = vld [vmem:[%s287 + $0x60] sm:$0xff]
        %v341 = vld [vmem:[%s287 + $0x68] sm:$0xff]
        %v342 = vld [vmem:[%s287 + $0x70] sm:$0xff]
        %v343 = vld [vmem:[%s287 + $0x78] sm:$0xff]
        %v344 = vld [vmem:[%s287 + $0x80] sm:$0xff]
        %v345 = vld [vmem:[%s287 + $0x88] sm:$0xff]
        %v346 = vld [vmem:[%s287 + $0x90] sm:$0xff]
        %v347 = vld [vmem:[%s287 + $0x98] sm:$0xff]
        %v348 = vld [vmem:[%s287 + $0xa0] sm:$0xff]
        %v349 = vld [vmem:[%s287 + $0xa8] sm:$0xff]
        %v350 = vld [vmem:[%s287 + $0xb0] sm:$0xff]
        %v351 = vld [vmem:[%s287 + $0xb8] sm:$0xff]
        %v352 = vld [vmem:[%s287 + $0xc0] sm:$0xff]
        %v353 = vld [vmem:[%s287 + $0xc8] sm:$0xff]
        %v354 = vld [vmem:[%s287 + $0xd0] sm:$0xff]
        %v355 = vld [vmem:[%s287 + $0xd8] sm:$0xff]
        %v356 = vld [vmem:[%s287 + $0xe0] sm:$0xff]
        %v357 = vld [vmem:[%s287 + $0xe8] sm:$0xff]
        %v358 = vld [vmem:[%s287 + $0xf0] sm:$0xff]
        %v359 = vld [vmem:[%s287 + $0xf8] sm:$0xff]
        %v360 = vld [vmem:[#allocation5] sm:$0xff]
        %v361 = vld [vmem:[#allocation5 + $0x8] sm:$0xff]
        %v362 = vld [vmem:[#allocation5 + $0x10] sm:$0xff]
        %v363 = vld [vmem:[#allocation5 + $0x18] sm:$0xff]
        %v364 = vld [vmem:[#allocation5 + $0x20] sm:$0xff]
        %v365 = vld [vmem:[#allocation5 + $0x28] sm:$0xff]
        %v366 = vld [vmem:[#allocation5 + $0x30] sm:$0xff]
        %v367 = vld [vmem:[#allocation5 + $0x38] sm:$0xff]
        %v368 = vld [vmem:[#allocation5 + $0x40] sm:$0xff]
        %v369 = vld [vmem:[#allocation5 + $0x48] sm:$0xff]
        %v370 = vld [vmem:[#allocation5 + $0x50] sm:$0xff]
        %v371 = vld [vmem:[#allocation5 + $0x58] sm:$0xff]
        %v372 = vld [vmem:[#allocation5 + $0x60] sm:$0xff]
        %v373 = vld [vmem:[#allocation5 + $0x68] sm:$0xff]
        %v374 = vld [vmem:[#allocation5 + $0x70] sm:$0xff]
        %v375 = vld [vmem:[#allocation5 + $0x78] sm:$0xff]
        %v376 = vld [vmem:[#allocation5 + $0x80] sm:$0xff]
        %v377 = vld [vmem:[#allocation5 + $0x88] sm:$0xff]
        %v378 = vld [vmem:[#allocation5 + $0x90] sm:$0xff]
        %v379 = vld [vmem:[#allocation5 + $0x98] sm:$0xff]
        %v380 = vld [vmem:[#allocation5 + $0xa0] sm:$0xff]
        %v381 = vld [vmem:[#allocation5 + $0xa8] sm:$0xff]
        %v382 = vld [vmem:[#allocation5 + $0xb0] sm:$0xff]
        %v383 = vld [vmem:[#allocation5 + $0xb8] sm:$0xff]
        %v384 = vld [vmem:[#allocation5 + $0xc0] sm:$0xff]
        %v385 = vld [vmem:[#allocation5 + $0xc8] sm:$0xff]
        %v386 = vld [vmem:[#allocation5 + $0xd0] sm:$0xff]
        %v387 = vld [vmem:[#allocation5 + $0xd8] sm:$0xff]
        %v388 = vld [vmem:[#allocation5 + $0xe0] sm:$0xff]
        %v389 = vld [vmem:[#allocation5 + $0xe8] sm:$0xff]
        %v390 = vld [vmem:[#allocation5 + $0xf0] sm:$0xff]
        %v391 = vld [vmem:[#allocation5 + $0xf8] sm:$0xff]
        %v392 = vld [vmem:[%s2] sm:$0x3]
        %v394 = vlaneseq
        %v395 = vshrl.u32 %v394, 7
        %v396 = vsub.s32 0, %v395
        %v397 = vrot.slane %v392, %v396
        %v398 = vlaneseq
        %v399 = vshrl.u32 %v398, 7
        %v400 = vsub.s32 1, %v399
        %v401 = vrot.slane %v392, %v400
        %404 = vmatprep.subr.mxu0 %v361
        %405 = vmatpush1.msra.mxu0 %v360
        %406 = vmatprep.subr.mxu0 %v363
        %407 = vmatpush1.msra.mxu0 %v362
        %408 = vmatprep.subr.mxu0 %v365
        %409 = vmatpush1.msra.mxu0 %v364
        %410 = vmatprep.subr.mxu0 %v367
        %411 = vmatpush1.msra.mxu0 %v366
        %412 = vmatprep.subr.mxu0 %v369
        %413 = vmatpush1.msra.mxu0 %v368
        %414 = vmatprep.subr.mxu0 %v371
        %415 = vmatpush1.msra.mxu0 %v370
        %416 = vmatprep.subr.mxu0 %v373
        %417 = vmatpush1.msra.mxu0 %v372
        %418 = vmatprep.subr.mxu0 %v375
        %419 = vmatpush1.msra.mxu0 %v374
        %420 = vmatprep.subr.mxu0 %v377
        %421 = vmatpush1.msra.mxu0 %v376
        %422 = vmatprep.subr.mxu0 %v379
        %423 = vmatpush1.msra.mxu0 %v378
        %424 = vmatprep.subr.mxu0 %v381
        %425 = vmatpush1.msra.mxu0 %v380
        %426 = vmatprep.subr.mxu0 %v383
        %427 = vmatpush1.msra.mxu0 %v382
        %428 = vmatprep.subr.mxu0 %v385
        %429 = vmatpush1.msra.mxu0 %v384
        %430 = vmatprep.subr.mxu0 %v387
        %431 = vmatpush1.msra.mxu0 %v386
        %432 = vmatprep.subr.mxu0 %v389
        %433 = vmatpush1.msra.mxu0 %v388
        %434 = vmatprep.subr.mxu0 %v391
        %435 = vmatpush1.msra.mxu0 %v390
        %436 = vmatprep.subr.mxu0 0.0
        %437 = vmatpush1.msra.mxu0 0.0
        %438 = vmatprep.subr.mxu0 0.0
        %439 = vmatpush1.msra.mxu0 0.0
        %440 = vmatprep.subr.mxu0 0.0
        %441 = vmatpush1.msra.mxu0 0.0
        %442 = vmatprep.subr.mxu0 0.0
        %443 = vmatpush1.msra.mxu0 0.0
        %444 = vmatprep.subr.mxu0 0.0
        %445 = vmatpush1.msra.mxu0 0.0
        %446 = vmatprep.subr.mxu0 0.0
        %447 = vmatpush1.msra.mxu0 0.0
        %448 = vmatprep.subr.mxu0 0.0
        %449 = vmatpush1.msra.mxu0 0.0
        %450 = vmatprep.subr.mxu0 0.0
        %451 = vmatpush1.msra.mxu0 0.0
        %452 = vmatprep.subr.mxu0 0.0
        %453 = vmatpush1.msra.mxu0 0.0
        %454 = vmatprep.subr.mxu0 0.0
        %455 = vmatpush1.msra.mxu0 0.0
        %456 = vmatprep.subr.mxu0 0.0
        %457 = vmatpush1.msra.mxu0 0.0
        %458 = vmatprep.subr.mxu0 0.0
        %459 = vmatpush1.msra.mxu0 0.0
        %460 = vmatprep.subr.mxu0 0.0
        %461 = vmatpush1.msra.mxu0 0.0
        %462 = vmatprep.subr.mxu0 0.0
        %463 = vmatpush1.msra.mxu0 0.0
        %464 = vmatprep.subr.mxu0 0.0
        %465 = vmatpush1.msra.mxu0 0.0
        %466 = vmatprep.subr.mxu0 0.0
        %467 = vmatpush1.msra.mxu0 0.0
        %468 = vmatprep.mubr.f32.mxu0 0.0
        %469 = vmatmul.mubr.f32.gmra.mrb[0].mxu0 %v328
        %v470 = vpop.f32.mrb[0].mxu0
        %v471 = vadd.f32 %v397, %v470
        %v472 = vpop.f32.mrb[0].mxu0
        %v473 = vadd.f32 %v401, %v472
        %474 = vmatprep.mubr.f32.mxu0 0.0
        %475 = vmatmul.mubr.f32.gmra.mrb[0].mxu0 %v329
        %v476 = vpop.f32.mrb[0].mxu0
        %v477 = vadd.f32 %v397, %v476
        %v478 = vpop.f32.mrb[0].mxu0
        %v479 = vadd.f32 %v401, %v478
        %480 = vmatprep.mubr.f32.mxu0 0.0
        %481 = vmatmul.mubr.f32.gmra.mrb[0].mxu0 %v330
        %v482 = vpop.f32.mrb[0].mxu0
        %v483 = vadd.f32 %v397, %v482
        %v484 = vpop.f32.mrb[0].mxu0
        %v485 = vadd.f32 %v401, %v484
        %486 = vmatprep.mubr.f32.mxu0 0.0
        %487 = vmatmul.mubr.f32.gmra.mrb[0].mxu0 %v331
        %v488 = vpop.f32.mrb[0].mxu0
        %v489 = vadd.f32 %v397, %v488
        %v490 = vpop.f32.mrb[0].mxu0
        %v491 = vadd.f32 %v401, %v490
        %492 = vmatprep.mubr.f32.mxu0 0.0
        %493 = vmatmul.mubr.f32.gmra.mrb[0].mxu0 %v332
        %v494 = vpop.f32.mrb[0].mxu0
        %v495 = vadd.f32 %v397, %v494
        %v496 = vpop.f32.mrb[0].mxu0
        %v497 = vadd.f32 %v401, %v496
        %498 = vmatprep.mubr.f32.mxu0 0.0
        %499 = vmatmul.mubr.f32.gmra.mrb[0].mxu0 %v333
        %v500 = vpop.f32.mrb[0].mxu0
        %v501 = vadd.f32 %v397, %v500
        %v502 = vpop.f32.mrb[0].mxu0
        %v503 = vadd.f32 %v401, %v502
        %504 = vmatprep.mubr.f32.mxu0 0.0
        %505 = vmatmul.mubr.f32.gmra.mrb[0].mxu0 %v334
        %v506 = vpop.f32.mrb[0].mxu0
        %v507 = vadd.f32 %v397, %v506
        %v508 = vpop.f32.mrb[0].mxu0
        %v509 = vadd.f32 %v401, %v508
        %510 = vmatprep.mubr.f32.mxu0 0.0
        %511 = vmatmul.mubr.f32.gmra.mrb[0].mxu0 %v335
        %v512 = vpop.f32.mrb[0].mxu0
        %v513 = vadd.f32 %v397, %v512
        %v514 = vpop.f32.mrb[0].mxu0
        %v515 = vadd.f32 %v401, %v514
        %516 = vmatprep.mubr.f32.mxu0 0.0
        %517 = vmatmul.mubr.f32.gmra.mrb[0].mxu0 %v336
        %v518 = vpop.f32.mrb[0].mxu0
        %v519 = vadd.f32 %v397, %v518
        %v520 = vpop.f32.mrb[0].mxu0
        %v521 = vadd.f32 %v401, %v520
        %522 = vmatprep.mubr.f32.mxu0 0.0
        %523 = vmatmul.mubr.f32.gmra.mrb[0].mxu0 %v337
        %v524 = vpop.f32.mrb[0].mxu0
        %v525 = vadd.f32 %v397, %v524
        %v526 = vpop.f32.mrb[0].mxu0
        %v527 = vadd.f32 %v401, %v526
        %528 = vmatprep.mubr.f32.mxu0 0.0
        %529 = vmatmul.mubr.f32.gmra.mrb[0].mxu0 %v338
        %v530 = vpop.f32.mrb[0].mxu0
        %v531 = vadd.f32 %v397, %v530
        %v532 = vpop.f32.mrb[0].mxu0
        %v533 = vadd.f32 %v401, %v532
        %534 = vmatprep.mubr.f32.mxu0 0.0
        %535 = vmatmul.mubr.f32.gmra.mrb[0].mxu0 %v339
        %v536 = vpop.f32.mrb[0].mxu0
        %v537 = vadd.f32 %v397, %v536
        %v538 = vpop.f32.mrb[0].mxu0
        %v539 = vadd.f32 %v401, %v538
        %540 = vmatprep.mubr.f32.mxu0 0.0
        %541 = vmatmul.mubr.f32.gmra.mrb[0].mxu0 %v340
        %v542 = vpop.f32.mrb[0].mxu0
        %v543 = vadd.f32 %v397, %v542
        %v544 = vpop.f32.mrb[0].mxu0
        %v545 = vadd.f32 %v401, %v544
        %546 = vmatprep.mubr.f32.mxu0 0.0
        %547 = vmatmul.mubr.f32.gmra.mrb[0].mxu0 %v341
        %v548 = vpop.f32.mrb[0].mxu0
        %v549 = vadd.f32 %v397, %v548
        %v550 = vpop.f32.mrb[0].mxu0
        %v551 = vadd.f32 %v401, %v550
        %552 = vmatprep.mubr.f32.mxu0 0.0
        %553 = vmatmul.mubr.f32.gmra.mrb[0].mxu0 %v342
        %v554 = vpop.f32.mrb[0].mxu0
        %v555 = vadd.f32 %v397, %v554
        %v556 = vpop.f32.mrb[0].mxu0
        %v557 = vadd.f32 %v401, %v556
        %558 = vmatprep.mubr.f32.mxu0 0.0
        %559 = vmatmul.mubr.f32.gmra.mrb[0].mxu0 %v343
        %v560 = vpop.f32.mrb[0].mxu0
        %v561 = vadd.f32 %v397, %v560
        %v562 = vpop.f32.mrb[0].mxu0
        %v563 = vadd.f32 %v401, %v562
        %564 = vmatprep.mubr.f32.mxu0 0.0
        %565 = vmatmul.mubr.f32.gmra.mrb[0].mxu0 %v344
        %v566 = vpop.f32.mrb[0].mxu0
        %v567 = vadd.f32 %v397, %v566
        %v568 = vpop.f32.mrb[0].mxu0
        %v569 = vadd.f32 %v401, %v568
        %570 = vmatprep.mubr.f32.mxu0 0.0
        %571 = vmatmul.mubr.f32.gmra.mrb[0].mxu0 %v345
        %v572 = vpop.f32.mrb[0].mxu0
        %v573 = vadd.f32 %v397, %v572
        %v574 = vpop.f32.mrb[0].mxu0
        %v575 = vadd.f32 %v401, %v574
        %576 = vmatprep.mubr.f32.mxu0 0.0
        %577 = vmatmul.mubr.f32.gmra.mrb[0].mxu0 %v346
        %v578 = vpop.f32.mrb[0].mxu0
        %v579 = vadd.f32 %v397, %v578
        %v580 = vpop.f32.mrb[0].mxu0
        %v581 = vadd.f32 %v401, %v580
        %582 = vmatprep.mubr.f32.mxu0 0.0
        %583 = vmatmul.mubr.f32.gmra.mrb[0].mxu0 %v347
        %v584 = vpop.f32.mrb[0].mxu0
        %v585 = vadd.f32 %v397, %v584
        %v586 = vpop.f32.mrb[0].mxu0
        %v587 = vadd.f32 %v401, %v586
        %588 = vmatprep.mubr.f32.mxu0 0.0
        %589 = vmatmul.mubr.f32.gmra.mrb[0].mxu0 %v348
        %v590 = vpop.f32.mrb[0].mxu0
        %v591 = vadd.f32 %v397, %v590
        %v592 = vpop.f32.mrb[0].mxu0
        %v593 = vadd.f32 %v401, %v592
        %594 = vmatprep.mubr.f32.mxu0 0.0
        %595 = vmatmul.mubr.f32.gmra.mrb[0].mxu0 %v349
        %v596 = vpop.f32.mrb[0].mxu0
        %v597 = vadd.f32 %v397, %v596
        %v598 = vpop.f32.mrb[0].mxu0
        %v599 = vadd.f32 %v401, %v598
        %600 = vmatprep.mubr.f32.mxu0 0.0
        %601 = vmatmul.mubr.f32.gmra.mrb[0].mxu0 %v350
        %v602 = vpop.f32.mrb[0].mxu0
        %v603 = vadd.f32 %v397, %v602
        %v604 = vpop.f32.mrb[0].mxu0
        %v605 = vadd.f32 %v401, %v604
        %606 = vmatprep.mubr.f32.mxu0 0.0
        %607 = vmatmul.mubr.f32.gmra.mrb[0].mxu0 %v351
        %v608 = vpop.f32.mrb[0].mxu0
        %v609 = vadd.f32 %v397, %v608
        %v610 = vpop.f32.mrb[0].mxu0
        %v611 = vadd.f32 %v401, %v610
        %612 = vmatprep.mubr.f32.mxu0 0.0
        %613 = vmatmul.mubr.f32.gmra.mrb[0].mxu0 %v352
        %v614 = vpop.f32.mrb[0].mxu0
        %v615 = vadd.f32 %v397, %v614
        %v616 = vpop.f32.mrb[0].mxu0
        %v617 = vadd.f32 %v401, %v616
        %618 = vmatprep.mubr.f32.mxu0 0.0
        %619 = vmatmul.mubr.f32.gmra.mrb[0].mxu0 %v353
        %v620 = vpop.f32.mrb[0].mxu0
        %v621 = vadd.f32 %v397, %v620
        %v622 = vpop.f32.mrb[0].mxu0
        %v623 = vadd.f32 %v401, %v622
        %624 = vmatprep.mubr.f32.mxu0 0.0
        %625 = vmatmul.mubr.f32.gmra.mrb[0].mxu0 %v354
        %v626 = vpop.f32.mrb[0].mxu0
        %v627 = vadd.f32 %v397, %v626
        %v628 = vpop.f32.mrb[0].mxu0
        %v629 = vadd.f32 %v401, %v628
        %630 = vmatprep.mubr.f32.mxu0 0.0
        %631 = vmatmul.mubr.f32.gmra.mrb[0].mxu0 %v355
        %v632 = vpop.f32.mrb[0].mxu0
        %v633 = vadd.f32 %v397, %v632
        %v634 = vpop.f32.mrb[0].mxu0
        %v635 = vadd.f32 %v401, %v634
        %636 = vmatprep.mubr.f32.mxu0 0.0
        %637 = vmatmul.mubr.f32.gmra.mrb[0].mxu0 %v356
        %v638 = vpop.f32.mrb[0].mxu0
        %v639 = vadd.f32 %v397, %v638
        %v640 = vpop.f32.mrb[0].mxu0
        %v641 = vadd.f32 %v401, %v640
        %642 = vmatprep.mubr.f32.mxu0 0.0
        %643 = vmatmul.mubr.f32.gmra.mrb[0].mxu0 %v357
        %v644 = vpop.f32.mrb[0].mxu0
        %v645 = vadd.f32 %v397, %v644
        %v646 = vpop.f32.mrb[0].mxu0
        %v647 = vadd.f32 %v401, %v646
        %648 = vmatprep.mubr.f32.mxu0 0.0
        %649 = vmatmul.mubr.f32.gmra.mrb[0].mxu0 %v358
        %v650 = vpop.f32.mrb[0].mxu0
        %v651 = vadd.f32 %v397, %v650
        %v652 = vpop.f32.mrb[0].mxu0
        %v653 = vadd.f32 %v401, %v652
        %654 = vmatprep.mubr.f32.mxu0 0.0
        %655 = vmatmul.mubr.f32.gmra.mrb[0].mxu0 %v359
        %v656 = vpop.f32.mrb[0].mxu0
        %v657 = vadd.f32 %v397, %v656
        %v658 = vpop.f32.mrb[0].mxu0
        %v659 = vadd.f32 %v401, %v658
        %660 = vdwg.mxu0
        %v661 = vadd.f32 %v471, %v473
        %662 = vadd.xlane.f32.xlu0 %v661
        %v663 = vpop.xlane.xlu0 %662
        %v664 = vadd.f32 %v477, %v479
        %665 = vadd.xlane.f32.xlu0 %v664
        %v666 = vpop.xlane.xlu0 %665
        %v667 = vadd.f32 %v483, %v485
        %668 = vadd.xlane.f32.xlu0 %v667
        %v669 = vpop.xlane.xlu0 %668
        %v670 = vadd.f32 %v489, %v491
        %671 = vadd.xlane.f32.xlu0 %v670
        %v672 = vpop.xlane.xlu0 %671
        %v673 = vadd.f32 %v495, %v497
        %674 = vadd.xlane.f32.xlu0 %v673
        %v675 = vpop.xlane.xlu0 %674
        %v676 = vadd.f32 %v501, %v503
        %677 = vadd.xlane.f32.xlu0 %v676
        %v678 = vpop.xlane.xlu0 %677
        %v679 = vadd.f32 %v507, %v509
        %680 = vadd.xlane.f32.xlu0 %v679
        %v681 = vpop.xlane.xlu0 %680
        %v682 = vadd.f32 %v513, %v515
        %683 = vadd.xlane.f32.xlu0 %v682
        %v684 = vpop.xlane.xlu0 %683
        %v685 = vadd.f32 %v519, %v521
        %686 = vadd.xlane.f32.xlu0 %v685
        %v687 = vpop.xlane.xlu0 %686
        %v688 = vadd.f32 %v525, %v527
        %689 = vadd.xlane.f32.xlu0 %v688
        %v690 = vpop.xlane.xlu0 %689
        %v691 = vadd.f32 %v531, %v533
        %692 = vadd.xlane.f32.xlu0 %v691
        %v693 = vpop.xlane.xlu0 %692
        %v694 = vadd.f32 %v537, %v539
        %695 = vadd.xlane.f32.xlu0 %v694
        %v696 = vpop.xlane.xlu0 %695
        %v697 = vadd.f32 %v543, %v545
        %698 = vadd.xlane.f32.xlu0 %v697
        %v699 = vpop.xlane.xlu0 %698
        %v700 = vadd.f32 %v549, %v551
        %701 = vadd.xlane.f32.xlu0 %v700
        %v702 = vpop.xlane.xlu0 %701
        %v703 = vadd.f32 %v555, %v557
        %704 = vadd.xlane.f32.xlu0 %v703
        %v705 = vpop.xlane.xlu0 %704
        %v706 = vadd.f32 %v561, %v563
        %707 = vadd.xlane.f32.xlu0 %v706
        %v708 = vpop.xlane.xlu0 %707
        %v709 = vadd.f32 %v567, %v569
        %710 = vadd.xlane.f32.xlu0 %v709
        %v711 = vpop.xlane.xlu0 %710
        %v712 = vadd.f32 %v573, %v575
        %713 = vadd.xlane.f32.xlu0 %v712
        %v714 = vpop.xlane.xlu0 %713
        %v715 = vadd.f32 %v579, %v581
        %716 = vadd.xlane.f32.xlu0 %v715
        %v717 = vpop.xlane.xlu0 %716
        %v718 = vadd.f32 %v585, %v587
        %719 = vadd.xlane.f32.xlu0 %v718
        %v720 = vpop.xlane.xlu0 %719
        %v721 = vadd.f32 %v591, %v593
        %722 = vadd.xlane.f32.xlu0 %v721
        %v723 = vpop.xlane.xlu0 %722
        %v724 = vadd.f32 %v597, %v599
        %725 = vadd.xlane.f32.xlu0 %v724
        %v726 = vpop.xlane.xlu0 %725
        %v727 = vadd.f32 %v603, %v605
        %728 = vadd.xlane.f32.xlu0 %v727
        %v729 = vpop.xlane.xlu0 %728
        %v730 = vadd.f32 %v609, %v611
        %731 = vadd.xlane.f32.xlu0 %v730
        %v732 = vpop.xlane.xlu0 %731
        %v733 = vadd.f32 %v615, %v617
        %734 = vadd.xlane.f32.xlu0 %v733
        %v735 = vpop.xlane.xlu0 %734
        %v736 = vadd.f32 %v621, %v623
        %737 = vadd.xlane.f32.xlu0 %v736
        %v738 = vpop.xlane.xlu0 %737
        %v739 = vadd.f32 %v627, %v629
        %740 = vadd.xlane.f32.xlu0 %v739
        %v741 = vpop.xlane.xlu0 %740
        %v742 = vadd.f32 %v633, %v635
        %743 = vadd.xlane.f32.xlu0 %v742
        %v744 = vpop.xlane.xlu0 %743
        %v745 = vadd.f32 %v639, %v641
        %746 = vadd.xlane.f32.xlu0 %v745
        %v747 = vpop.xlane.xlu0 %746
        %v748 = vadd.f32 %v645, %v647
        %749 = vadd.xlane.f32.xlu0 %v748
        %v750 = vpop.xlane.xlu0 %749
        %v751 = vadd.f32 %v651, %v653
        %752 = vadd.xlane.f32.xlu0 %v751
        %v753 = vpop.xlane.xlu0 %752
        %v754 = vadd.f32 %v657, %v659
        %755 = vadd.xlane.f32.xlu0 %v754
        %v756 = vpop.xlane.xlu0 %755
        %v757 = vrcp.pop 256.0
        %v758 = vmul.f32 %v663, %v757
        %v759 = vmul.f32 %v666, %v757
        %v760 = vmul.f32 %v669, %v757
        %v761 = vmul.f32 %v672, %v757
        %v762 = vmul.f32 %v675, %v757
        %v763 = vmul.f32 %v678, %v757
        %v764 = vmul.f32 %v681, %v757
        %v765 = vmul.f32 %v684, %v757
        %v766 = vmul.f32 %v687, %v757
        %v767 = vmul.f32 %v690, %v757
        %v768 = vmul.f32 %v693, %v757
        %v769 = vmul.f32 %v696, %v757
        %v770 = vmul.f32 %v699, %v757
        %v771 = vmul.f32 %v702, %v757
        %v772 = vmul.f32 %v705, %v757
        %v773 = vmul.f32 %v708, %v757
        %v774 = vmul.f32 %v711, %v757
        %v775 = vmul.f32 %v714, %v757
        %v776 = vmul.f32 %v717, %v757
        %v777 = vmul.f32 %v720, %v757
        %v778 = vmul.f32 %v723, %v757
        %v779 = vmul.f32 %v726, %v757
        %v780 = vmul.f32 %v729, %v757
        %v781 = vmul.f32 %v732, %v757
        %v782 = vmul.f32 %v735, %v757
        %v783 = vmul.f32 %v738, %v757
        %v784 = vmul.f32 %v741, %v757
        %v785 = vmul.f32 %v744, %v757
        %v786 = vmul.f32 %v747, %v757
        %v787 = vmul.f32 %v750, %v757
        %v788 = vmul.f32 %v753, %v757
        %v789 = vmul.f32 %v756, %v757
        %v790 = vsub.f32 %v471, %v758
        %v791 = vsub.f32 %v473, %v758
        %v792 = vsub.f32 %v477, %v759
        %v793 = vsub.f32 %v479, %v759
        %v794 = vsub.f32 %v483, %v760
        %v795 = vsub.f32 %v485, %v760
        %v796 = vsub.f32 %v489, %v761
        %v797 = vsub.f32 %v491, %v761
        %v798 = vsub.f32 %v495, %v762
        %v799 = vsub.f32 %v497, %v762
        %v800 = vsub.f32 %v501, %v763
        %v801 = vsub.f32 %v503, %v763
        %v802 = vsub.f32 %v507, %v764
        %v803 = vsub.f32 %v509, %v764
        %v804 = vsub.f32 %v513, %v765
        %v805 = vsub.f32 %v515, %v765
        %v806 = vsub.f32 %v519, %v766
        %v807 = vsub.f32 %v521, %v766
        %v808 = vsub.f32 %v525, %v767
        %v809 = vsub.f32 %v527, %v767
        %v810 = vsub.f32 %v531, %v768
        %v811 = vsub.f32 %v533, %v768
        %v812 = vsub.f32 %v537, %v769
        %v813 = vsub.f32 %v539, %v769
        %v814 = vsub.f32 %v543, %v770
        %v815 = vsub.f32 %v545, %v770
        %v816 = vsub.f32 %v549, %v771
        %v817 = vsub.f32 %v551, %v771
        %v818 = vsub.f32 %v555, %v772
        %v819 = vsub.f32 %v557, %v772
        %v820 = vsub.f32 %v561, %v773
        %v821 = vsub.f32 %v563, %v773
        %v822 = vsub.f32 %v567, %v774
        %v823 = vsub.f32 %v569, %v774
        %v824 = vsub.f32 %v573, %v775
        %v825 = vsub.f32 %v575, %v775
        %v826 = vsub.f32 %v579, %v776
        %v827 = vsub.f32 %v581, %v776
        %v828 = vsub.f32 %v585, %v777
        %v829 = vsub.f32 %v587, %v777
        %v830 = vsub.f32 %v591, %v778
        %v831 = vsub.f32 %v593, %v778
        %v832 = vsub.f32 %v597, %v779
        %v833 = vsub.f32 %v599, %v779
        %v834 = vsub.f32 %v603, %v780
        %v835 = vsub.f32 %v605, %v780
        %v836 = vsub.f32 %v609, %v781
        %v837 = vsub.f32 %v611, %v781
        %v838 = vsub.f32 %v615, %v782
        %v839 = vsub.f32 %v617, %v782
        %v840 = vsub.f32 %v621, %v783
        %v841 = vsub.f32 %v623, %v783
        %v842 = vsub.f32 %v627, %v784
        %v843 = vsub.f32 %v629, %v784
        %v844 = vsub.f32 %v633, %v785
        %v845 = vsub.f32 %v635, %v785
        %v846 = vsub.f32 %v639, %v786
        %v847 = vsub.f32 %v641, %v786
        %v848 = vsub.f32 %v645, %v787
        %v849 = vsub.f32 %v647, %v787
        %v850 = vsub.f32 %v651, %v788
        %v851 = vsub.f32 %v653, %v788
        %v852 = vsub.f32 %v657, %v789
        %v853 = vsub.f32 %v659, %v789
        %v854 = vmul.f32 %v790, %v790
        %v855 = vmul.f32 %v791, %v791
        %v856 = vmul.f32 %v792, %v792
        %v857 = vmul.f32 %v793, %v793
        %v858 = vmul.f32 %v794, %v794
        %v859 = vmul.f32 %v795, %v795
        %v860 = vmul.f32 %v796, %v796
        %v861 = vmul.f32 %v797, %v797
        %v862 = vmul.f32 %v798, %v798
        %v863 = vmul.f32 %v799, %v799
        %v864 = vmul.f32 %v800, %v800
        %v865 = vmul.f32 %v801, %v801
        %v866 = vmul.f32 %v802, %v802
        %v867 = vmul.f32 %v803, %v803
        %v868 = vmul.f32 %v804, %v804
        %v869 = vmul.f32 %v805, %v805
        %v870 = vmul.f32 %v806, %v806
        %v871 = vmul.f32 %v807, %v807
        %v872 = vmul.f32 %v808, %v808
        %v873 = vmul.f32 %v809, %v809
        %v874 = vmul.f32 %v810, %v810
        %v875 = vmul.f32 %v811, %v811
        %v876 = vmul.f32 %v812, %v812
        %v877 = vmul.f32 %v813, %v813
        %v878 = vmul.f32 %v814, %v814
        %v879 = vmul.f32 %v815, %v815
        %v880 = vmul.f32 %v816, %v816
        %v881 = vmul.f32 %v817, %v817
        %v882 = vmul.f32 %v818, %v818
        %v883 = vmul.f32 %v819, %v819
        %v884 = vmul.f32 %v820, %v820
        %v885 = vmul.f32 %v821, %v821
        %v886 = vmul.f32 %v822, %v822
        %v887 = vmul.f32 %v823, %v823
        %v888 = vmul.f32 %v824, %v824
        %v889 = vmul.f32 %v825, %v825
        %v890 = vmul.f32 %v826, %v826
        %v891 = vmul.f32 %v827, %v827
        %v892 = vmul.f32 %v828, %v828
        %v893 = vmul.f32 %v829, %v829
        %v894 = vmul.f32 %v830, %v830
        %v895 = vmul.f32 %v831, %v831
        %v896 = vmul.f32 %v832, %v832
        %v897 = vmul.f32 %v833, %v833
        %v898 = vmul.f32 %v834, %v834
        %v899 = vmul.f32 %v835, %v835
        %v900 = vmul.f32 %v836, %v836
        %v901 = vmul.f32 %v837, %v837
        %v902 = vmul.f32 %v838, %v838
        %v903 = vmul.f32 %v839, %v839
        %v904 = vmul.f32 %v840, %v840
        %v905 = vmul.f32 %v841, %v841
        %v906 = vmul.f32 %v842, %v842
        %v907 = vmul.f32 %v843, %v843
        %v908 = vmul.f32 %v844, %v844
        %v909 = vmul.f32 %v845, %v845
        %v910 = vmul.f32 %v846, %v846
        %v911 = vmul.f32 %v847, %v847
        %v912 = vmul.f32 %v848, %v848
        %v913 = vmul.f32 %v849, %v849
        %v914 = vmul.f32 %v850, %v850
        %v915 = vmul.f32 %v851, %v851
        %v916 = vmul.f32 %v852, %v852
        %v917 = vmul.f32 %v853, %v853
        %v918 = vadd.f32 %v854, %v855
        %919 = vadd.xlane.f32.xlu0 %v918
        %v920 = vpop.xlane.xlu0 %919
        %v921 = vadd.f32 %v856, %v857
        %922 = vadd.xlane.f32.xlu0 %v921
        %v923 = vpop.xlane.xlu0 %922
        %v924 = vadd.f32 %v858, %v859
        %925 = vadd.xlane.f32.xlu0 %v924
        %v926 = vpop.xlane.xlu0 %925
        %v927 = vadd.f32 %v860, %v861
        %928 = vadd.xlane.f32.xlu0 %v927
        %v929 = vpop.xlane.xlu0 %928
        %v930 = vadd.f32 %v862, %v863
        %931 = vadd.xlane.f32.xlu0 %v930
        %v932 = vpop.xlane.xlu0 %931
        %v933 = vadd.f32 %v864, %v865
        %934 = vadd.xlane.f32.xlu0 %v933
        %v935 = vpop.xlane.xlu0 %934
        %v936 = vadd.f32 %v866, %v867
        %937 = vadd.xlane.f32.xlu0 %v936
        %v938 = vpop.xlane.xlu0 %937
        %v939 = vadd.f32 %v868, %v869
        %940 = vadd.xlane.f32.xlu0 %v939
        %v941 = vpop.xlane.xlu0 %940
        %v942 = vadd.f32 %v870, %v871
        %943 = vadd.xlane.f32.xlu0 %v942
        %v944 = vpop.xlane.xlu0 %943
        %v945 = vadd.f32 %v872, %v873
        %946 = vadd.xlane.f32.xlu0 %v945
        %v947 = vpop.xlane.xlu0 %946
        %v948 = vadd.f32 %v874, %v875
        %949 = vadd.xlane.f32.xlu0 %v948
        %v950 = vpop.xlane.xlu0 %949
        %v951 = vadd.f32 %v876, %v877
        %952 = vadd.xlane.f32.xlu0 %v951
        %v953 = vpop.xlane.xlu0 %952
        %v954 = vadd.f32 %v878, %v879
        %955 = vadd.xlane.f32.xlu0 %v954
        %v956 = vpop.xlane.xlu0 %955
        %v957 = vadd.f32 %v880, %v881
        %958 = vadd.xlane.f32.xlu0 %v957
        %v959 = vpop.xlane.xlu0 %958
        %v960 = vadd.f32 %v882, %v883
        %961 = vadd.xlane.f32.xlu0 %v960
        %v962 = vpop.xlane.xlu0 %961
        %v963 = vadd.f32 %v884, %v885
        %964 = vadd.xlane.f32.xlu0 %v963
        %v965 = vpop.xlane.xlu0 %964
        %v966 = vadd.f32 %v886, %v887
        %967 = vadd.xlane.f32.xlu0 %v966
        %v968 = vpop.xlane.xlu0 %967
        %v969 = vadd.f32 %v888, %v889
        %970 = vadd.xlane.f32.xlu0 %v969
        %v971 = vpop.xlane.xlu0 %970
        %v972 = vadd.f32 %v890, %v891
        %973 = vadd.xlane.f32.xlu0 %v972
        %v974 = vpop.xlane.xlu0 %973
        %v975 = vadd.f32 %v892, %v893
        %976 = vadd.xlane.f32.xlu0 %v975
        %v977 = vpop.xlane.xlu0 %976
        %v978 = vadd.f32 %v894, %v895
        %979 = vadd.xlane.f32.xlu0 %v978
        %v980 = vpop.xlane.xlu0 %979
        %v981 = vadd.f32 %v896, %v897
        %982 = vadd.xlane.f32.xlu0 %v981
        %v983 = vpop.xlane.xlu0 %982
        %v984 = vadd.f32 %v898, %v899
        %985 = vadd.xlane.f32.xlu0 %v984
        %v986 = vpop.xlane.xlu0 %985
        %v987 = vadd.f32 %v900, %v901
        %988 = vadd.xlane.f32.xlu0 %v987
        %v989 = vpop.xlane.xlu0 %988
        %v990 = vadd.f32 %v902, %v903
        %991 = vadd.xlane.f32.xlu0 %v990
        %v992 = vpop.xlane.xlu0 %991
        %v993 = vadd.f32 %v904, %v905
        %994 = vadd.xlane.f32.xlu0 %v993
        %v995 = vpop.xlane.xlu0 %994
        %v996 = vadd.f32 %v906, %v907
        %997 = vadd.xlane.f32.xlu0 %v996
        %v998 = vpop.xlane.xlu0 %997
        %v999 = vadd.f32 %v908, %v909
        %1000 = vadd.xlane.f32.xlu0 %v999
        %v1001 = vpop.xlane.xlu0 %1000
        %v1002 = vadd.f32 %v910, %v911
        %1003 = vadd.xlane.f32.xlu0 %v1002
        %v1004 = vpop.xlane.xlu0 %1003
        %v1005 = vadd.f32 %v912, %v913
        %1006 = vadd.xlane.f32.xlu0 %v1005
        %v1007 = vpop.xlane.xlu0 %1006
        %v1008 = vadd.f32 %v914, %v915
        %1009 = vadd.xlane.f32.xlu0 %v1008
        %v1010 = vpop.xlane.xlu0 %1009
        %v1011 = vadd.f32 %v916, %v917
        %1012 = vadd.xlane.f32.xlu0 %v1011
        %v1013 = vpop.xlane.xlu0 %1012
        %v1014 = vmul.f32 %v920, %v757
        %v1015 = vmul.f32 %v923, %v757
        %v1016 = vmul.f32 %v926, %v757
        %v1017 = vmul.f32 %v929, %v757
        %v1018 = vmul.f32 %v932, %v757
        %v1019 = vmul.f32 %v935, %v757
        %v1020 = vmul.f32 %v938, %v757
        %v1021 = vmul.f32 %v941, %v757
        %v1022 = vmul.f32 %v944, %v757
        %v1023 = vmul.f32 %v947, %v757
        %v1024 = vmul.f32 %v950, %v757
        %v1025 = vmul.f32 %v953, %v757
        %v1026 = vmul.f32 %v956, %v757
        %v1027 = vmul.f32 %v959, %v757
        %v1028 = vmul.f32 %v962, %v757
        %v1029 = vmul.f32 %v965, %v757
        %v1030 = vmul.f32 %v968, %v757
        %v1031 = vmul.f32 %v971, %v757
        %v1032 = vmul.f32 %v974, %v757
        %v1033 = vmul.f32 %v977, %v757
        %v1034 = vmul.f32 %v980, %v757
        %v1035 = vmul.f32 %v983, %v757
        %v1036 = vmul.f32 %v986, %v757
        %v1037 = vmul.f32 %v989, %v757
        %v1038 = vmul.f32 %v992, %v757
        %v1039 = vmul.f32 %v995, %v757
        %v1040 = vmul.f32 %v998, %v757
        %v1041 = vmul.f32 %v1001, %v757
        %v1042 = vmul.f32 %v1004, %v757
        %v1043 = vmul.f32 %v1007, %v757
        %v1044 = vmul.f32 %v1010, %v757
        %v1045 = vmul.f32 %v1013, %v757
        %v1046 = vadd.f32 %v1014, 1e-08
        %v1047 = vadd.f32 %v1015, 1e-08
        %v1048 = vadd.f32 %v1016, 1e-08
        %v1049 = vadd.f32 %v1017, 1e-08
        %v1050 = vadd.f32 %v1018, 1e-08
        %v1051 = vadd.f32 %v1019, 1e-08
        %v1052 = vadd.f32 %v1020, 1e-08
        %v1053 = vadd.f32 %v1021, 1e-08
        %v1054 = vadd.f32 %v1022, 1e-08
        %v1055 = vadd.f32 %v1023, 1e-08
        %v1056 = vadd.f32 %v1024, 1e-08
        %v1057 = vadd.f32 %v1025, 1e-08
        %v1058 = vadd.f32 %v1026, 1e-08
        %v1059 = vadd.f32 %v1027, 1e-08
        %v1060 = vadd.f32 %v1028, 1e-08
        %v1061 = vadd.f32 %v1029, 1e-08
        %v1062 = vadd.f32 %v1030, 1e-08
        %v1063 = vadd.f32 %v1031, 1e-08
        %v1064 = vadd.f32 %v1032, 1e-08
        %v1065 = vadd.f32 %v1033, 1e-08
        %v1066 = vadd.f32 %v1034, 1e-08
        %v1067 = vadd.f32 %v1035, 1e-08
        %v1068 = vadd.f32 %v1036, 1e-08
        %v1069 = vadd.f32 %v1037, 1e-08
        %v1070 = vadd.f32 %v1038, 1e-08
        %v1071 = vadd.f32 %v1039, 1e-08
        %v1072 = vadd.f32 %v1040, 1e-08
        %v1073 = vadd.f32 %v1041, 1e-08
        %v1074 = vadd.f32 %v1042, 1e-08
        %v1075 = vadd.f32 %v1043, 1e-08
        %v1076 = vadd.f32 %v1044, 1e-08
        %v1077 = vadd.f32 %v1045, 1e-08
        %v1078 = vrsqrt.pop %v1046
        %v1079 = vrsqrt.pop %v1047
        %v1080 = vrsqrt.pop %v1048
        %v1081 = vrsqrt.pop %v1049
        %v1082 = vrsqrt.pop %v1050
        %v1083 = vrsqrt.pop %v1051
        %v1084 = vrsqrt.pop %v1052
        %v1085 = vrsqrt.pop %v1053
        %v1086 = vrsqrt.pop %v1054
        %v1087 = vrsqrt.pop %v1055
        %v1088 = vrsqrt.pop %v1056
        %v1089 = vrsqrt.pop %v1057
        %v1090 = vrsqrt.pop %v1058
        %v1091 = vrsqrt.pop %v1059
        %v1092 = vrsqrt.pop %v1060
        %v1093 = vrsqrt.pop %v1061
        %v1094 = vrsqrt.pop %v1062
        %v1095 = vrsqrt.pop %v1063
        %v1096 = vrsqrt.pop %v1064
        %v1097 = vrsqrt.pop %v1065
        %v1098 = vrsqrt.pop %v1066
        %v1099 = vrsqrt.pop %v1067
        %v1100 = vrsqrt.pop %v1068
        %v1101 = vrsqrt.pop %v1069
        %v1102 = vrsqrt.pop %v1070
        %v1103 = vrsqrt.pop %v1071
        %v1104 = vrsqrt.pop %v1072
        %v1105 = vrsqrt.pop %v1073
        %v1106 = vrsqrt.pop %v1074
        %v1107 = vrsqrt.pop %v1075
        %v1108 = vrsqrt.pop %v1076
        %v1109 = vrsqrt.pop %v1077
        %v1110 = vmul.f32 %v790, %v1078
        %v1111 = vmul.f32 %v791, %v1078
        %v1112 = vmul.f32 %v792, %v1079
        %v1113 = vmul.f32 %v793, %v1079
        %v1114 = vmul.f32 %v794, %v1080
        %v1115 = vmul.f32 %v795, %v1080
        %v1116 = vmul.f32 %v796, %v1081
        %v1117 = vmul.f32 %v797, %v1081
        %v1118 = vmul.f32 %v798, %v1082
        %v1119 = vmul.f32 %v799, %v1082
        %v1120 = vmul.f32 %v800, %v1083
        %v1121 = vmul.f32 %v801, %v1083
        %v1122 = vmul.f32 %v802, %v1084
        %v1123 = vmul.f32 %v803, %v1084
        %v1124 = vmul.f32 %v804, %v1085
        %v1125 = vmul.f32 %v805, %v1085
        %v1126 = vmul.f32 %v806, %v1086
        %v1127 = vmul.f32 %v807, %v1086
        %v1128 = vmul.f32 %v808, %v1087
        %v1129 = vmul.f32 %v809, %v1087
        %v1130 = vmul.f32 %v810, %v1088
        %v1131 = vmul.f32 %v811, %v1088
        %v1132 = vmul.f32 %v812, %v1089
        %v1133 = vmul.f32 %v813, %v1089
        %v1134 = vmul.f32 %v814, %v1090
        %v1135 = vmul.f32 %v815, %v1090
        %v1136 = vmul.f32 %v816, %v1091
        %v1137 = vmul.f32 %v817, %v1091
        %v1138 = vmul.f32 %v818, %v1092
        %v1139 = vmul.f32 %v819, %v1092
        %v1140 = vmul.f32 %v820, %v1093
        %v1141 = vmul.f32 %v821, %v1093
        %v1142 = vmul.f32 %v822, %v1094
        %v1143 = vmul.f32 %v823, %v1094
        %v1144 = vmul.f32 %v824, %v1095
        %v1145 = vmul.f32 %v825, %v1095
        %v1146 = vmul.f32 %v826, %v1096
        %v1147 = vmul.f32 %v827, %v1096
        %v1148 = vmul.f32 %v828, %v1097
        %v1149 = vmul.f32 %v829, %v1097
        %v1150 = vmul.f32 %v830, %v1098
        %v1151 = vmul.f32 %v831, %v1098
        %v1152 = vmul.f32 %v832, %v1099
        %v1153 = vmul.f32 %v833, %v1099
        %v1154 = vmul.f32 %v834, %v1100
        %v1155 = vmul.f32 %v835, %v1100
        %v1156 = vmul.f32 %v836, %v1101
        %v1157 = vmul.f32 %v837, %v1101
        %v1158 = vmul.f32 %v838, %v1102
        %v1159 = vmul.f32 %v839, %v1102
        %v1160 = vmul.f32 %v840, %v1103
        %v1161 = vmul.f32 %v841, %v1103
        %v1162 = vmul.f32 %v842, %v1104
        %v1163 = vmul.f32 %v843, %v1104
        %v1164 = vmul.f32 %v844, %v1105
        %v1165 = vmul.f32 %v845, %v1105
        %v1166 = vmul.f32 %v846, %v1106
        %v1167 = vmul.f32 %v847, %v1106
        %v1168 = vmul.f32 %v848, %v1107
        %v1169 = vmul.f32 %v849, %v1107
        %v1170 = vmul.f32 %v850, %v1108
        %v1171 = vmul.f32 %v851, %v1108
        %v1172 = vmul.f32 %v852, %v1109
        %v1173 = vmul.f32 %v853, %v1109
        %v1174 = vld [vmem:[%s3] sm:$0x3]
        %v1176 = vlaneseq
        %v1177 = vshrl.u32 %v1176, 7
        %v1178 = vsub.s32 0, %v1177
        %v1179 = vrot.slane %v1174, %v1178
        %v1180 = vlaneseq
        %v1181 = vshrl.u32 %v1180, 7
        %v1182 = vsub.s32 1, %v1181
        %v1183 = vrot.slane %v1174, %v1182
        %v1186 = vmul.f32 %v1110, %v1179
        %v1187 = vmul.f32 %v1111, %v1183
        %v1188 = vmul.f32 %v1112, %v1179
        %v1189 = vmul.f32 %v1113, %v1183
        %v1190 = vmul.f32 %v1114, %v1179
        %v1191 = vmul.f32 %v1115, %v1183
        %v1192 = vmul.f32 %v1116, %v1179
        %v1193 = vmul.f32 %v1117, %v1183
        %v1194 = vmul.f32 %v1118, %v1179
        %v1195 = vmul.f32 %v1119, %v1183
        %v1196 = vmul.f32 %v1120, %v1179
        %v1197 = vmul.f32 %v1121, %v1183
        %v1198 = vmul.f32 %v1122, %v1179
        %v1199 = vmul.f32 %v1123, %v1183
        %v1200 = vmul.f32 %v1124, %v1179
        %v1201 = vmul.f32 %v1125, %v1183
        %v1202 = vmul.f32 %v1126, %v1179
        %v1203 = vmul.f32 %v1127, %v1183
        %v1204 = vmul.f32 %v1128, %v1179
        %v1205 = vmul.f32 %v1129, %v1183
        %v1206 = vmul.f32 %v1130, %v1179
        %v1207 = vmul.f32 %v1131, %v1183
        %v1208 = vmul.f32 %v1132, %v1179
        %v1209 = vmul.f32 %v1133, %v1183
        %v1210 = vmul.f32 %v1134, %v1179
        %v1211 = vmul.f32 %v1135, %v1183
        %v1212 = vmul.f32 %v1136, %v1179
        %v1213 = vmul.f32 %v1137, %v1183
        %v1214 = vmul.f32 %v1138, %v1179
        %v1215 = vmul.f32 %v1139, %v1183
        %v1216 = vmul.f32 %v1140, %v1179
        %v1217 = vmul.f32 %v1141, %v1183
        %v1218 = vmul.f32 %v1142, %v1179
        %v1219 = vmul.f32 %v1143, %v1183
        %v1220 = vmul.f32 %v1144, %v1179
        %v1221 = vmul.f32 %v1145, %v1183
        %v1222 = vmul.f32 %v1146, %v1179
        %v1223 = vmul.f32 %v1147, %v1183
        %v1224 = vmul.f32 %v1148, %v1179
        %v1225 = vmul.f32 %v1149, %v1183
        %v1226 = vmul.f32 %v1150, %v1179
        %v1227 = vmul.f32 %v1151, %v1183
        %v1228 = vmul.f32 %v1152, %v1179
        %v1229 = vmul.f32 %v1153, %v1183
        %v1230 = vmul.f32 %v1154, %v1179
        %v1231 = vmul.f32 %v1155, %v1183
        %v1232 = vmul.f32 %v1156, %v1179
        %v1233 = vmul.f32 %v1157, %v1183
        %v1234 = vmul.f32 %v1158, %v1179
        %v1235 = vmul.f32 %v1159, %v1183
        %v1236 = vmul.f32 %v1160, %v1179
        %v1237 = vmul.f32 %v1161, %v1183
        %v1238 = vmul.f32 %v1162, %v1179
        %v1239 = vmul.f32 %v1163, %v1183
        %v1240 = vmul.f32 %v1164, %v1179
        %v1241 = vmul.f32 %v1165, %v1183
        %v1242 = vmul.f32 %v1166, %v1179
        %v1243 = vmul.f32 %v1167, %v1183
        %v1244 = vmul.f32 %v1168, %v1179
        %v1245 = vmul.f32 %v1169, %v1183
        %v1246 = vmul.f32 %v1170, %v1179
        %v1247 = vmul.f32 %v1171, %v1183
        %v1248 = vmul.f32 %v1172, %v1179
        %v1249 = vmul.f32 %v1173, %v1183
        %v1250 = vld [vmem:[%s4] sm:$0x3]
        %v1252 = vlaneseq
        %v1253 = vshrl.u32 %v1252, 7
        %v1254 = vsub.s32 0, %v1253
        %v1255 = vrot.slane %v1250, %v1254
        %v1256 = vlaneseq
        %v1257 = vshrl.u32 %v1256, 7
        %v1258 = vsub.s32 1, %v1257
        %v1259 = vrot.slane %v1250, %v1258
        %v1262 = vadd.f32 %v1186, %v1255
        %v1263 = vadd.f32 %v1187, %v1259
        %v1264 = vadd.f32 %v1188, %v1255
        %v1265 = vadd.f32 %v1189, %v1259
        %v1266 = vadd.f32 %v1190, %v1255
        %v1267 = vadd.f32 %v1191, %v1259
        %v1268 = vadd.f32 %v1192, %v1255
        %v1269 = vadd.f32 %v1193, %v1259
        %v1270 = vadd.f32 %v1194, %v1255
        %v1271 = vadd.f32 %v1195, %v1259
        %v1272 = vadd.f32 %v1196, %v1255
        %v1273 = vadd.f32 %v1197, %v1259
        %v1274 = vadd.f32 %v1198, %v1255
        %v1275 = vadd.f32 %v1199, %v1259
        %v1276 = vadd.f32 %v1200, %v1255
        %v1277 = vadd.f32 %v1201, %v1259
        %v1278 = vadd.f32 %v1202, %v1255
        %v1279 = vadd.f32 %v1203, %v1259
        %v1280 = vadd.f32 %v1204, %v1255
        %v1281 = vadd.f32 %v1205, %v1259
        %v1282 = vadd.f32 %v1206, %v1255
        %v1283 = vadd.f32 %v1207, %v1259
        %v1284 = vadd.f32 %v1208, %v1255
        %v1285 = vadd.f32 %v1209, %v1259
        %v1286 = vadd.f32 %v1210, %v1255
        %v1287 = vadd.f32 %v1211, %v1259
        %v1288 = vadd.f32 %v1212, %v1255
        %v1289 = vadd.f32 %v1213, %v1259
        %v1290 = vadd.f32 %v1214, %v1255
        %v1291 = vadd.f32 %v1215, %v1259
        %v1292 = vadd.f32 %v1216, %v1255
        %v1293 = vadd.f32 %v1217, %v1259
        %v1294 = vadd.f32 %v1218, %v1255
        %v1295 = vadd.f32 %v1219, %v1259
        %v1296 = vadd.f32 %v1220, %v1255
        %v1297 = vadd.f32 %v1221, %v1259
        %v1298 = vadd.f32 %v1222, %v1255
        %v1299 = vadd.f32 %v1223, %v1259
        %v1300 = vadd.f32 %v1224, %v1255
        %v1301 = vadd.f32 %v1225, %v1259
        %v1302 = vadd.f32 %v1226, %v1255
        %v1303 = vadd.f32 %v1227, %v1259
        %v1304 = vadd.f32 %v1228, %v1255
        %v1305 = vadd.f32 %v1229, %v1259
        %v1306 = vadd.f32 %v1230, %v1255
        %v1307 = vadd.f32 %v1231, %v1259
        %v1308 = vadd.f32 %v1232, %v1255
        %v1309 = vadd.f32 %v1233, %v1259
        %v1310 = vadd.f32 %v1234, %v1255
        %v1311 = vadd.f32 %v1235, %v1259
        %v1312 = vadd.f32 %v1236, %v1255
        %v1313 = vadd.f32 %v1237, %v1259
        %v1314 = vadd.f32 %v1238, %v1255
        %v1315 = vadd.f32 %v1239, %v1259
        %v1316 = vadd.f32 %v1240, %v1255
        %v1317 = vadd.f32 %v1241, %v1259
        %v1318 = vadd.f32 %v1242, %v1255
        %v1319 = vadd.f32 %v1243, %v1259
        %v1320 = vadd.f32 %v1244, %v1255
        %v1321 = vadd.f32 %v1245, %v1259
        %v1322 = vadd.f32 %v1246, %v1255
        %v1323 = vadd.f32 %v1247, %v1259
        %v1324 = vadd.f32 %v1248, %v1255
        %v1325 = vadd.f32 %v1249, %v1259
        %v1326 = vmax.f32 %v1262, 0.0
        %v1327 = vmax.f32 %v1263, 0.0
        %v1328 = vmax.f32 %v1264, 0.0
        %v1329 = vmax.f32 %v1265, 0.0
        %v1330 = vmax.f32 %v1266, 0.0
        %v1331 = vmax.f32 %v1267, 0.0
        %v1332 = vmax.f32 %v1268, 0.0
        %v1333 = vmax.f32 %v1269, 0.0
        %v1334 = vmax.f32 %v1270, 0.0
        %v1335 = vmax.f32 %v1271, 0.0
        %v1336 = vmax.f32 %v1272, 0.0
        %v1337 = vmax.f32 %v1273, 0.0
        %v1338 = vmax.f32 %v1274, 0.0
        %v1339 = vmax.f32 %v1275, 0.0
        %v1340 = vmax.f32 %v1276, 0.0
        %v1341 = vmax.f32 %v1277, 0.0
        %v1342 = vmax.f32 %v1278, 0.0
        %v1343 = vmax.f32 %v1279, 0.0
        %v1344 = vmax.f32 %v1280, 0.0
        %v1345 = vmax.f32 %v1281, 0.0
        %v1346 = vmax.f32 %v1282, 0.0
        %v1347 = vmax.f32 %v1283, 0.0
        %v1348 = vmax.f32 %v1284, 0.0
        %v1349 = vmax.f32 %v1285, 0.0
        %v1350 = vmax.f32 %v1286, 0.0
        %v1351 = vmax.f32 %v1287, 0.0
        %v1352 = vmax.f32 %v1288, 0.0
        %v1353 = vmax.f32 %v1289, 0.0
        %v1354 = vmax.f32 %v1290, 0.0
        %v1355 = vmax.f32 %v1291, 0.0
        %v1356 = vmax.f32 %v1292, 0.0
        %v1357 = vmax.f32 %v1293, 0.0
        %v1358 = vmax.f32 %v1294, 0.0
        %v1359 = vmax.f32 %v1295, 0.0
        %v1360 = vmax.f32 %v1296, 0.0
        %v1361 = vmax.f32 %v1297, 0.0
        %v1362 = vmax.f32 %v1298, 0.0
        %v1363 = vmax.f32 %v1299, 0.0
        %v1364 = vmax.f32 %v1300, 0.0
        %v1365 = vmax.f32 %v1301, 0.0
        %v1366 = vmax.f32 %v1302, 0.0
        %v1367 = vmax.f32 %v1303, 0.0
        %v1368 = vmax.f32 %v1304, 0.0
        %v1369 = vmax.f32 %v1305, 0.0
        %v1370 = vmax.f32 %v1306, 0.0
        %v1371 = vmax.f32 %v1307, 0.0
        %v1372 = vmax.f32 %v1308, 0.0
        %v1373 = vmax.f32 %v1309, 0.0
        %v1374 = vmax.f32 %v1310, 0.0
        %v1375 = vmax.f32 %v1311, 0.0
        %v1376 = vmax.f32 %v1312, 0.0
        %v1377 = vmax.f32 %v1313, 0.0
        %v1378 = vmax.f32 %v1314, 0.0
        %v1379 = vmax.f32 %v1315, 0.0
        %v1380 = vmax.f32 %v1316, 0.0
        %v1381 = vmax.f32 %v1317, 0.0
        %v1382 = vmax.f32 %v1318, 0.0
        %v1383 = vmax.f32 %v1319, 0.0
        %v1384 = vmax.f32 %v1320, 0.0
        %v1385 = vmax.f32 %v1321, 0.0
        %v1386 = vmax.f32 %v1322, 0.0
        %v1387 = vmax.f32 %v1323, 0.0
        %v1388 = vmax.f32 %v1324, 0.0
        %v1389 = vmax.f32 %v1325, 0.0
        %v1390 = vld [vmem:[#allocation7] sm:$0xff]
        %v1391 = vld [vmem:[#allocation7 + $0x8] sm:$0xff]
        %v1392 = vld [vmem:[#allocation7 + $0x10] sm:$0xff]
        %v1393 = vld [vmem:[#allocation7 + $0x18] sm:$0xff]
        %v1394 = vld [vmem:[#allocation7 + $0x20] sm:$0xff]
        %v1395 = vld [vmem:[#allocation7 + $0x28] sm:$0xff]
        %v1396 = vld [vmem:[#allocation7 + $0x30] sm:$0xff]
        %v1397 = vld [vmem:[#allocation7 + $0x38] sm:$0xff]
        %v1398 = vld [vmem:[#allocation7 + $0x40] sm:$0xff]
        %v1399 = vld [vmem:[#allocation7 + $0x48] sm:$0xff]
        %v1400 = vld [vmem:[#allocation7 + $0x50] sm:$0xff]
        %v1401 = vld [vmem:[#allocation7 + $0x58] sm:$0xff]
        %v1402 = vld [vmem:[#allocation7 + $0x60] sm:$0xff]
        %v1403 = vld [vmem:[#allocation7 + $0x68] sm:$0xff]
        %v1404 = vld [vmem:[#allocation7 + $0x70] sm:$0xff]
        %v1405 = vld [vmem:[#allocation7 + $0x78] sm:$0xff]
        %v1406 = vld [vmem:[#allocation7 + $0x80] sm:$0xff]
        %v1407 = vld [vmem:[#allocation7 + $0x88] sm:$0xff]
        %v1408 = vld [vmem:[#allocation7 + $0x90] sm:$0xff]
        %v1409 = vld [vmem:[#allocation7 + $0x98] sm:$0xff]
        %v1410 = vld [vmem:[#allocation7 + $0xa0] sm:$0xff]
        %v1411 = vld [vmem:[#allocation7 + $0xa8] sm:$0xff]
        %v1412 = vld [vmem:[#allocation7 + $0xb0] sm:$0xff]
        %v1413 = vld [vmem:[#allocation7 + $0xb8] sm:$0xff]
        %v1414 = vld [vmem:[#allocation7 + $0xc0] sm:$0xff]
        %v1415 = vld [vmem:[#allocation7 + $0xc8] sm:$0xff]
        %v1416 = vld [vmem:[#allocation7 + $0xd0] sm:$0xff]
        %v1417 = vld [vmem:[#allocation7 + $0xd8] sm:$0xff]
        %v1418 = vld [vmem:[#allocation7 + $0xe0] sm:$0xff]
        %v1419 = vld [vmem:[#allocation7 + $0xe8] sm:$0xff]
        %v1420 = vld [vmem:[#allocation7 + $0xf0] sm:$0xff]
        %v1421 = vld [vmem:[#allocation7 + $0xf8] sm:$0xff]
        %v1422 = vld [vmem:[%s6] sm:$0x1]
        %v1424 = vlaneseq
        %v1425 = vshrl.u32 %v1424, 7
        %v1426 = vsub.s32 0, %v1425
        %v1427 = vrot.slane %v1422, %v1426
        %1429 = vmatprep.subr.mxu0 0.0
        %1430 = vmatpush1.msra.mxu0 %v1390
        %1431 = vmatprep.subr.mxu0 0.0
        %1432 = vmatpush1.msra.mxu0 %v1391
        %1433 = vmatprep.subr.mxu0 0.0
        %1434 = vmatpush1.msra.mxu0 %v1392
        %1435 = vmatprep.subr.mxu0 0.0
        %1436 = vmatpush1.msra.mxu0 %v1393
        %1437 = vmatprep.subr.mxu0 0.0
        %1438 = vmatpush1.msra.mxu0 %v1394
        %1439 = vmatprep.subr.mxu0 0.0
        %1440 = vmatpush1.msra.mxu0 %v1395
        %1441 = vmatprep.subr.mxu0 0.0
        %1442 = vmatpush1.msra.mxu0 %v1396
        %1443 = vmatprep.subr.mxu0 0.0
        %1444 = vmatpush1.msra.mxu0 %v1397
        %1445 = vmatprep.subr.mxu0 0.0
        %1446 = vmatpush1.msra.mxu0 %v1398
        %1447 = vmatprep.subr.mxu0 0.0
        %1448 = vmatpush1.msra.mxu0 %v1399
        %1449 = vmatprep.subr.mxu0 0.0
        %1450 = vmatpush1.msra.mxu0 %v1400
        %1451 = vmatprep.subr.mxu0 0.0
        %1452 = vmatpush1.msra.mxu0 %v1401
        %1453 = vmatprep.subr.mxu0 0.0
        %1454 = vmatpush1.msra.mxu0 %v1402
        %1455 = vmatprep.subr.mxu0 0.0
        %1456 = vmatpush1.msra.mxu0 %v1403
        %1457 = vmatprep.subr.mxu0 0.0
        %1458 = vmatpush1.msra.mxu0 %v1404
        %1459 = vmatprep.subr.mxu0 0.0
        %1460 = vmatpush1.msra.mxu0 %v1405
        %1461 = vmatprep.subr.mxu0 0.0
        %1462 = vmatpush1.msra.mxu0 %v1406
        %1463 = vmatprep.subr.mxu0 0.0
        %1464 = vmatpush1.msra.mxu0 %v1407
        %1465 = vmatprep.subr.mxu0 0.0
        %1466 = vmatpush1.msra.mxu0 %v1408
        %1467 = vmatprep.subr.mxu0 0.0
        %1468 = vmatpush1.msra.mxu0 %v1409
        %1469 = vmatprep.subr.mxu0 0.0
        %1470 = vmatpush1.msra.mxu0 %v1410
        %1471 = vmatprep.subr.mxu0 0.0
        %1472 = vmatpush1.msra.mxu0 %v1411
        %1473 = vmatprep.subr.mxu0 0.0
        %1474 = vmatpush1.msra.mxu0 %v1412
        %1475 = vmatprep.subr.mxu0 0.0
        %1476 = vmatpush1.msra.mxu0 %v1413
        %1477 = vmatprep.subr.mxu0 0.0
        %1478 = vmatpush1.msra.mxu0 %v1414
        %1479 = vmatprep.subr.mxu0 0.0
        %1480 = vmatpush1.msra.mxu0 %v1415
        %1481 = vmatprep.subr.mxu0 0.0
        %1482 = vmatpush1.msra.mxu0 %v1416
        %1483 = vmatprep.subr.mxu0 0.0
        %1484 = vmatpush1.msra.mxu0 %v1417
        %1485 = vmatprep.subr.mxu0 0.0
        %1486 = vmatpush1.msra.mxu0 %v1418
        %1487 = vmatprep.subr.mxu0 0.0
        %1488 = vmatpush1.msra.mxu0 %v1419
        %1489 = vmatprep.subr.mxu0 0.0
        %1490 = vmatpush1.msra.mxu0 %v1420
        %1491 = vmatprep.subr.mxu0 0.0
        %1492 = vmatpush1.msra.mxu0 %v1421
        %1493 = vmatprep.mubr.f32.mxu0 %v1327
        %1494 = vmatmul.mubr.f32.gmra.mrb[0].mxu0 %v1326
        %v1495 = vpop.f32.mrb[0].mxu0
        %v1496 = vadd.f32 %v1427, %v1495
        %v1497 = vpop.f32.mrb[0].mxu0
        %1498 = vmatprep.mubr.f32.mxu0 %v1329
        %1499 = vmatmul.mubr.f32.gmra.mrb[0].mxu0 %v1328
        %v1500 = vpop.f32.mrb[0].mxu0
        %v1501 = vadd.f32 %v1427, %v1500
        %v1502 = vpop.f32.mrb[0].mxu0
        %1503 = vmatprep.mubr.f32.mxu0 %v1331
        %1504 = vmatmul.mubr.f32.gmra.mrb[0].mxu0 %v1330
        %v1505 = vpop.f32.mrb[0].mxu0
        %v1506 = vadd.f32 %v1427, %v1505
        %v1507 = vpop.f32.mrb[0].mxu0
        %1508 = vmatprep.mubr.f32.mxu0 %v1333
        %1509 = vmatmul.mubr.f32.gmra.mrb[0].mxu0 %v1332
        %v1510 = vpop.f32.mrb[0].mxu0
        %v1511 = vadd.f32 %v1427, %v1510
        %v1512 = vpop.f32.mrb[0].mxu0
        %1513 = vmatprep.mubr.f32.mxu0 %v1335
        %1514 = vmatmul.mubr.f32.gmra.mrb[0].mxu0 %v1334
        %v1515 = vpop.f32.mrb[0].mxu0
        %v1516 = vadd.f32 %v1427, %v1515
        %v1517 = vpop.f32.mrb[0].mxu0
        %1518 = vmatprep.mubr.f32.mxu0 %v1337
        %1519 = vmatmul.mubr.f32.gmra.mrb[0].mxu0 %v1336
        %v1520 = vpop.f32.mrb[0].mxu0
        %v1521 = vadd.f32 %v1427, %v1520
        %v1522 = vpop.f32.mrb[0].mxu0
        %1523 = vmatprep.mubr.f32.mxu0 %v1339
        %1524 = vmatmul.mubr.f32.gmra.mrb[0].mxu0 %v1338
        %v1525 = vpop.f32.mrb[0].mxu0
        %v1526 = vadd.f32 %v1427, %v1525
        %v1527 = vpop.f32.mrb[0].mxu0
        %1528 = vmatprep.mubr.f32.mxu0 %v1341
        %1529 = vmatmul.mubr.f32.gmra.mrb[0].mxu0 %v1340
        %v1530 = vpop.f32.mrb[0].mxu0
        %v1531 = vadd.f32 %v1427, %v1530
        %v1532 = vpop.f32.mrb[0].mxu0
        %1533 = vmatprep.mubr.f32.mxu0 %v1343
        %1534 = vmatmul.mubr.f32.gmra.mrb[0].mxu0 %v1342
        %v1535 = vpop.f32.mrb[0].mxu0
        %v1536 = vadd.f32 %v1427, %v1535
        %v1537 = vpop.f32.mrb[0].mxu0
        %1538 = vmatprep.mubr.f32.mxu0 %v1345
        %1539 = vmatmul.mubr.f32.gmra.mrb[0].mxu0 %v1344
        %v1540 = vpop.f32.mrb[0].mxu0
        %v1541 = vadd.f32 %v1427, %v1540
        %v1542 = vpop.f32.mrb[0].mxu0
        %1543 = vmatprep.mubr.f32.mxu0 %v1347
        %1544 = vmatmul.mubr.f32.gmra.mrb[0].mxu0 %v1346
        %v1545 = vpop.f32.mrb[0].mxu0
        %v1546 = vadd.f32 %v1427, %v1545
        %v1547 = vpop.f32.mrb[0].mxu0
        %1548 = vmatprep.mubr.f32.mxu0 %v1349
        %1549 = vmatmul.mubr.f32.gmra.mrb[0].mxu0 %v1348
        %v1550 = vpop.f32.mrb[0].mxu0
        %v1551 = vadd.f32 %v1427, %v1550
        %v1552 = vpop.f32.mrb[0].mxu0
        %1553 = vmatprep.mubr.f32.mxu0 %v1351
        %1554 = vmatmul.mubr.f32.gmra.mrb[0].mxu0 %v1350
        %v1555 = vpop.f32.mrb[0].mxu0
        %v1556 = vadd.f32 %v1427, %v1555
        %v1557 = vpop.f32.mrb[0].mxu0
        %1558 = vmatprep.mubr.f32.mxu0 %v1353
        %1559 = vmatmul.mubr.f32.gmra.mrb[0].mxu0 %v1352
        %v1560 = vpop.f32.mrb[0].mxu0
        %v1561 = vadd.f32 %v1427, %v1560
        %v1562 = vpop.f32.mrb[0].mxu0
        %1563 = vmatprep.mubr.f32.mxu0 %v1355
        %1564 = vmatmul.mubr.f32.gmra.mrb[0].mxu0 %v1354
        %v1565 = vpop.f32.mrb[0].mxu0
        %v1566 = vadd.f32 %v1427, %v1565
        %v1567 = vpop.f32.mrb[0].mxu0
        %1568 = vmatprep.mubr.f32.mxu0 %v1357
        %1569 = vmatmul.mubr.f32.gmra.mrb[0].mxu0 %v1356
        %v1570 = vpop.f32.mrb[0].mxu0
        %v1571 = vadd.f32 %v1427, %v1570
        %v1572 = vpop.f32.mrb[0].mxu0
        %1573 = vmatprep.mubr.f32.mxu0 %v1359
        %1574 = vmatmul.mubr.f32.gmra.mrb[0].mxu0 %v1358
        %v1575 = vpop.f32.mrb[0].mxu0
        %v1576 = vadd.f32 %v1427, %v1575
        %v1577 = vpop.f32.mrb[0].mxu0
        %1578 = vmatprep.mubr.f32.mxu0 %v1361
        %1579 = vmatmul.mubr.f32.gmra.mrb[0].mxu0 %v1360
        %v1580 = vpop.f32.mrb[0].mxu0
        %v1581 = vadd.f32 %v1427, %v1580
        %v1582 = vpop.f32.mrb[0].mxu0
        %1583 = vmatprep.mubr.f32.mxu0 %v1363
        %1584 = vmatmul.mubr.f32.gmra.mrb[0].mxu0 %v1362
        %v1585 = vpop.f32.mrb[0].mxu0
        %v1586 = vadd.f32 %v1427, %v1585
        %v1587 = vpop.f32.mrb[0].mxu0
        %1588 = vmatprep.mubr.f32.mxu0 %v1365
        %1589 = vmatmul.mubr.f32.gmra.mrb[0].mxu0 %v1364
        %v1590 = vpop.f32.mrb[0].mxu0
        %v1591 = vadd.f32 %v1427, %v1590
        %v1592 = vpop.f32.mrb[0].mxu0
        %1593 = vmatprep.mubr.f32.mxu0 %v1367
        %1594 = vmatmul.mubr.f32.gmra.mrb[0].mxu0 %v1366
        %v1595 = vpop.f32.mrb[0].mxu0
        %v1596 = vadd.f32 %v1427, %v1595
        %v1597 = vpop.f32.mrb[0].mxu0
        %1598 = vmatprep.mubr.f32.mxu0 %v1369
        %1599 = vmatmul.mubr.f32.gmra.mrb[0].mxu0 %v1368
        %v1600 = vpop.f32.mrb[0].mxu0
        %v1601 = vadd.f32 %v1427, %v1600
        %v1602 = vpop.f32.mrb[0].mxu0
        %1603 = vmatprep.mubr.f32.mxu0 %v1371
        %1604 = vmatmul.mubr.f32.gmra.mrb[0].mxu0 %v1370
        %v1605 = vpop.f32.mrb[0].mxu0
        %v1606 = vadd.f32 %v1427, %v1605
        %v1607 = vpop.f32.mrb[0].mxu0
        %1608 = vmatprep.mubr.f32.mxu0 %v1373
        %1609 = vmatmul.mubr.f32.gmra.mrb[0].mxu0 %v1372
        %v1610 = vpop.f32.mrb[0].mxu0
        %v1611 = vadd.f32 %v1427, %v1610
        %v1612 = vpop.f32.mrb[0].mxu0
        %1613 = vmatprep.mubr.f32.mxu0 %v1375
        %1614 = vmatmul.mubr.f32.gmra.mrb[0].mxu0 %v1374
        %v1615 = vpop.f32.mrb[0].mxu0
        %v1616 = vadd.f32 %v1427, %v1615
        %v1617 = vpop.f32.mrb[0].mxu0
        %1618 = vmatprep.mubr.f32.mxu0 %v1377
        %1619 = vmatmul.mubr.f32.gmra.mrb[0].mxu0 %v1376
        %v1620 = vpop.f32.mrb[0].mxu0
        %v1621 = vadd.f32 %v1427, %v1620
        %v1622 = vpop.f32.mrb[0].mxu0
        %1623 = vmatprep.mubr.f32.mxu0 %v1379
        %1624 = vmatmul.mubr.f32.gmra.mrb[0].mxu0 %v1378
        %v1625 = vpop.f32.mrb[0].mxu0
        %v1626 = vadd.f32 %v1427, %v1625
        %v1627 = vpop.f32.mrb[0].mxu0
        %1628 = vmatprep.mubr.f32.mxu0 %v1381
        %1629 = vmatmul.mubr.f32.gmra.mrb[0].mxu0 %v1380
        %v1630 = vpop.f32.mrb[0].mxu0
        %v1631 = vadd.f32 %v1427, %v1630
        %v1632 = vpop.f32.mrb[0].mxu0
        %1633 = vmatprep.mubr.f32.mxu0 %v1383
        %1634 = vmatmul.mubr.f32.gmra.mrb[0].mxu0 %v1382
        %v1635 = vpop.f32.mrb[0].mxu0
        %v1636 = vadd.f32 %v1427, %v1635
        %v1637 = vpop.f32.mrb[0].mxu0
        %1638 = vmatprep.mubr.f32.mxu0 %v1385
        %1639 = vmatmul.mubr.f32.gmra.mrb[0].mxu0 %v1384
        %v1640 = vpop.f32.mrb[0].mxu0
        %v1641 = vadd.f32 %v1427, %v1640
        %v1642 = vpop.f32.mrb[0].mxu0
        %1643 = vmatprep.mubr.f32.mxu0 %v1387
        %1644 = vmatmul.mubr.f32.gmra.mrb[0].mxu0 %v1386
        %v1645 = vpop.f32.mrb[0].mxu0
        %v1646 = vadd.f32 %v1427, %v1645
        %v1647 = vpop.f32.mrb[0].mxu0
        %1648 = vmatprep.mubr.f32.mxu0 %v1389
        %1649 = vmatmul.mubr.f32.gmra.mrb[0].mxu0 %v1388
        %v1650 = vpop.f32.mrb[0].mxu0
        %v1651 = vadd.f32 %v1427, %v1650
        %v1652 = vpop.f32.mrb[0].mxu0
        %1653 = vdwg.mxu0
        %v1654 = vxor.u32 %v1496, 2147483648
        %v1655 = vxor.u32 %v1501, 2147483648
        %v1656 = vxor.u32 %v1506, 2147483648
        %v1657 = vxor.u32 %v1511, 2147483648
        %v1658 = vxor.u32 %v1516, 2147483648
        %v1659 = vxor.u32 %v1521, 2147483648
        %v1660 = vxor.u32 %v1526, 2147483648
        %v1661 = vxor.u32 %v1531, 2147483648
        %v1662 = vxor.u32 %v1536, 2147483648
        %v1663 = vxor.u32 %v1541, 2147483648
        %v1664 = vxor.u32 %v1546, 2147483648
        %v1665 = vxor.u32 %v1551, 2147483648
        %v1666 = vxor.u32 %v1556, 2147483648
        %v1667 = vxor.u32 %v1561, 2147483648
        %v1668 = vxor.u32 %v1566, 2147483648
        %v1669 = vxor.u32 %v1571, 2147483648
        %v1670 = vxor.u32 %v1576, 2147483648
        %v1671 = vxor.u32 %v1581, 2147483648
        %v1672 = vxor.u32 %v1586, 2147483648
        %v1673 = vxor.u32 %v1591, 2147483648
        %v1674 = vxor.u32 %v1596, 2147483648
        %v1675 = vxor.u32 %v1601, 2147483648
        %v1676 = vxor.u32 %v1606, 2147483648
        %v1677 = vxor.u32 %v1611, 2147483648
        %v1678 = vxor.u32 %v1616, 2147483648
        %v1679 = vxor.u32 %v1621, 2147483648
        %v1680 = vxor.u32 %v1626, 2147483648
        %v1681 = vxor.u32 %v1631, 2147483648
        %v1682 = vxor.u32 %v1636, 2147483648
        %v1683 = vxor.u32 %v1641, 2147483648
        %v1684 = vxor.u32 %v1646, 2147483648
        %v1685 = vxor.u32 %v1651, 2147483648
        %v1686 = vmul.f32 %v1654, 1.442695
        %v1687 = vpow.pop %v1686
        %v1688 = vmul.f32 %v1655, 1.442695
        %v1689 = vpow.pop %v1688
        %v1690 = vmul.f32 %v1656, 1.442695
        %v1691 = vpow.pop %v1690
        %v1692 = vmul.f32 %v1657, 1.442695
        %v1693 = vpow.pop %v1692
        %v1694 = vmul.f32 %v1658, 1.442695
        %v1695 = vpow.pop %v1694
        %v1696 = vmul.f32 %v1659, 1.442695
        %v1697 = vpow.pop %v1696
        %v1698 = vmul.f32 %v1660, 1.442695
        %v1699 = vpow.pop %v1698
        %v1700 = vmul.f32 %v1661, 1.442695
        %v1701 = vpow.pop %v1700
        %v1702 = vmul.f32 %v1662, 1.442695
        %v1703 = vpow.pop %v1702
        %v1704 = vmul.f32 %v1663, 1.442695
        %v1705 = vpow.pop %v1704
        %v1706 = vmul.f32 %v1664, 1.442695
        %v1707 = vpow.pop %v1706
        %v1708 = vmul.f32 %v1665, 1.442695
        %v1709 = vpow.pop %v1708
        %v1710 = vmul.f32 %v1666, 1.442695
        %v1711 = vpow.pop %v1710
        %v1712 = vmul.f32 %v1667, 1.442695
        %v1713 = vpow.pop %v1712
        %v1714 = vmul.f32 %v1668, 1.442695
        %v1715 = vpow.pop %v1714
        %v1716 = vmul.f32 %v1669, 1.442695
        %v1717 = vpow.pop %v1716
        %v1718 = vmul.f32 %v1670, 1.442695
        %v1719 = vpow.pop %v1718
        %v1720 = vmul.f32 %v1671, 1.442695
        %v1721 = vpow.pop %v1720
        %v1722 = vmul.f32 %v1672, 1.442695
        %v1723 = vpow.pop %v1722
        %v1724 = vmul.f32 %v1673, 1.442695
        %v1725 = vpow.pop %v1724
        %v1726 = vmul.f32 %v1674, 1.442695
        %v1727 = vpow.pop %v1726
        %v1728 = vmul.f32 %v1675, 1.442695
        %v1729 = vpow.pop %v1728
        %v1730 = vmul.f32 %v1676, 1.442695
        %v1731 = vpow.pop %v1730
        %v1732 = vmul.f32 %v1677, 1.442695
        %v1733 = vpow.pop %v1732
        %v1734 = vmul.f32 %v1678, 1.442695
        %v1735 = vpow.pop %v1734
        %v1736 = vmul.f32 %v1679, 1.442695
        %v1737 = vpow.pop %v1736
        %v1738 = vmul.f32 %v1680, 1.442695
        %v1739 = vpow.pop %v1738
        %v1740 = vmul.f32 %v1681, 1.442695
        %v1741 = vpow.pop %v1740
        %v1742 = vmul.f32 %v1682, 1.442695
        %v1743 = vpow.pop %v1742
        %v1744 = vmul.f32 %v1683, 1.442695
        %v1745 = vpow.pop %v1744
        %v1746 = vmul.f32 %v1684, 1.442695
        %v1747 = vpow.pop %v1746
        %v1748 = vmul.f32 %v1685, 1.442695
        %v1749 = vpow.pop %v1748
        %v1750 = vadd.f32 %v1687, 1.0
        %v1751 = vadd.f32 %v1689, 1.0
        %v1752 = vadd.f32 %v1691, 1.0
        %v1753 = vadd.f32 %v1693, 1.0
        %v1754 = vadd.f32 %v1695, 1.0
        %v1755 = vadd.f32 %v1697, 1.0
        %v1756 = vadd.f32 %v1699, 1.0
        %v1757 = vadd.f32 %v1701, 1.0
        %v1758 = vadd.f32 %v1703, 1.0
        %v1759 = vadd.f32 %v1705, 1.0
        %v1760 = vadd.f32 %v1707, 1.0
        %v1761 = vadd.f32 %v1709, 1.0
        %v1762 = vadd.f32 %v1711, 1.0
        %v1763 = vadd.f32 %v1713, 1.0
        %v1764 = vadd.f32 %v1715, 1.0
        %v1765 = vadd.f32 %v1717, 1.0
        %v1766 = vadd.f32 %v1719, 1.0
        %v1767 = vadd.f32 %v1721, 1.0
        %v1768 = vadd.f32 %v1723, 1.0
        %v1769 = vadd.f32 %v1725, 1.0
        %v1770 = vadd.f32 %v1727, 1.0
        %v1771 = vadd.f32 %v1729, 1.0
        %v1772 = vadd.f32 %v1731, 1.0
        %v1773 = vadd.f32 %v1733, 1.0
        %v1774 = vadd.f32 %v1735, 1.0
        %v1775 = vadd.f32 %v1737, 1.0
        %v1776 = vadd.f32 %v1739, 1.0
        %v1777 = vadd.f32 %v1741, 1.0
        %v1778 = vadd.f32 %v1743, 1.0
        %v1779 = vadd.f32 %v1745, 1.0
        %v1780 = vadd.f32 %v1747, 1.0
        %v1781 = vadd.f32 %v1749, 1.0
        %v1782 = vrcp.pop %v1750
        %v1783 = vmul.f32 1.0, %v1782
        %v1784 = vrcp.pop %v1751
        %v1785 = vmul.f32 1.0, %v1784
        %v1786 = vrcp.pop %v1752
        %v1787 = vmul.f32 1.0, %v1786
        %v1788 = vrcp.pop %v1753
        %v1789 = vmul.f32 1.0, %v1788
        %v1790 = vrcp.pop %v1754
        %v1791 = vmul.f32 1.0, %v1790
        %v1792 = vrcp.pop %v1755
        %v1793 = vmul.f32 1.0, %v1792
        %v1794 = vrcp.pop %v1756
        %v1795 = vmul.f32 1.0, %v1794
        %v1796 = vrcp.pop %v1757
        %v1797 = vmul.f32 1.0, %v1796
        %v1798 = vrcp.pop %v1758
        %v1799 = vmul.f32 1.0, %v1798
        %v1800 = vrcp.pop %v1759
        %v1801 = vmul.f32 1.0, %v1800
        %v1802 = vrcp.pop %v1760
        %v1803 = vmul.f32 1.0, %v1802
        %v1804 = vrcp.pop %v1761
        %v1805 = vmul.f32 1.0, %v1804
        %v1806 = vrcp.pop %v1762
        %v1807 = vmul.f32 1.0, %v1806
        %v1808 = vrcp.pop %v1763
        %v1809 = vmul.f32 1.0, %v1808
        %v1810 = vrcp.pop %v1764
        %v1811 = vmul.f32 1.0, %v1810
        %v1812 = vrcp.pop %v1765
        %v1813 = vmul.f32 1.0, %v1812
        %v1814 = vrcp.pop %v1766
        %v1815 = vmul.f32 1.0, %v1814
        %v1816 = vrcp.pop %v1767
        %v1817 = vmul.f32 1.0, %v1816
        %v1818 = vrcp.pop %v1768
        %v1819 = vmul.f32 1.0, %v1818
        %v1820 = vrcp.pop %v1769
        %v1821 = vmul.f32 1.0, %v1820
        %v1822 = vrcp.pop %v1770
        %v1823 = vmul.f32 1.0, %v1822
        %v1824 = vrcp.pop %v1771
        %v1825 = vmul.f32 1.0, %v1824
        %v1826 = vrcp.pop %v1772
        %v1827 = vmul.f32 1.0, %v1826
        %v1828 = vrcp.pop %v1773
        %v1829 = vmul.f32 1.0, %v1828
        %v1830 = vrcp.pop %v1774
        %v1831 = vmul.f32 1.0, %v1830
        %v1832 = vrcp.pop %v1775
        %v1833 = vmul.f32 1.0, %v1832
        %v1834 = vrcp.pop %v1776
        %v1835 = vmul.f32 1.0, %v1834
        %v1836 = vrcp.pop %v1777
        %v1837 = vmul.f32 1.0, %v1836
        %v1838 = vrcp.pop %v1778
        %v1839 = vmul.f32 1.0, %v1838
        %v1840 = vrcp.pop %v1779
        %v1841 = vmul.f32 1.0, %v1840
        %v1842 = vrcp.pop %v1780
        %v1843 = vmul.f32 1.0, %v1842
        %v1844 = vrcp.pop %v1781
        %v1845 = vmul.f32 1.0, %v1844
        %1846 = vst [vmem:[%s325] sm:$0xff] %v1783
        %1847 = vst [vmem:[%s325 + $0x8] sm:$0xff] %v1785
        %1848 = vst [vmem:[%s325 + $0x10] sm:$0xff] %v1787
        %1849 = vst [vmem:[%s325 + $0x18] sm:$0xff] %v1789
        %1850 = vst [vmem:[%s325 + $0x20] sm:$0xff] %v1791
        %1851 = vst [vmem:[%s325 + $0x28] sm:$0xff] %v1793
        %1852 = vst [vmem:[%s325 + $0x30] sm:$0xff] %v1795
        %1853 = vst [vmem:[%s325 + $0x38] sm:$0xff] %v1797
        %1854 = vst [vmem:[%s325 + $0x40] sm:$0xff] %v1799
        %1855 = vst [vmem:[%s325 + $0x48] sm:$0xff] %v1801
        %1856 = vst [vmem:[%s325 + $0x50] sm:$0xff] %v1803
        %1857 = vst [vmem:[%s325 + $0x58] sm:$0xff] %v1805
        %1858 = vst [vmem:[%s325 + $0x60] sm:$0xff] %v1807
        %1859 = vst [vmem:[%s325 + $0x68] sm:$0xff] %v1809
        %1860 = vst [vmem:[%s325 + $0x70] sm:$0xff] %v1811
        %1861 = vst [vmem:[%s325 + $0x78] sm:$0xff] %v1813
        %1862 = vst [vmem:[%s325 + $0x80] sm:$0xff] %v1815
        %1863 = vst [vmem:[%s325 + $0x88] sm:$0xff] %v1817
        %1864 = vst [vmem:[%s325 + $0x90] sm:$0xff] %v1819
        %1865 = vst [vmem:[%s325 + $0x98] sm:$0xff] %v1821
        %1866 = vst [vmem:[%s325 + $0xa0] sm:$0xff] %v1823
        %1867 = vst [vmem:[%s325 + $0xa8] sm:$0xff] %v1825
        %1868 = vst [vmem:[%s325 + $0xb0] sm:$0xff] %v1827
        %1869 = vst [vmem:[%s325 + $0xb8] sm:$0xff] %v1829
        %1870 = vst [vmem:[%s325 + $0xc0] sm:$0xff] %v1831
        %1871 = vst [vmem:[%s325 + $0xc8] sm:$0xff] %v1833
        %1872 = vst [vmem:[%s325 + $0xd0] sm:$0xff] %v1835
        %1873 = vst [vmem:[%s325 + $0xd8] sm:$0xff] %v1837
        %1874 = vst [vmem:[%s325 + $0xe0] sm:$0xff] %v1839
        %1875 = vst [vmem:[%s325 + $0xe8] sm:$0xff] %v1841
        %1876 = vst [vmem:[%s325 + $0xf0] sm:$0xff] %v1843
        %1877 = vst [vmem:[%s325 + $0xf8] sm:$0xff] %v1845
        %s1878 = sand.u32 %s185, 1
        %s1879 = scalar_lea.sflag [#allocation4], %s1878
        %s1880 = sand.u32 %s185, 1
        %s1881 = smul.addr %s1880, 256
        %s1882 = scalar_lea.vmem [#allocation8], %s1881
        // Predicated region
        $region61: #{tpu_custom_call.1} parent=47 // pred_check
          %p1883 = pneg %p195
        $region62: #{tpu_custom_call.1} parent=47 // pred_check_branch
          %1885 = sbr.rel (%p1883) target = $region64
        $region63: #{tpu_custom_call.1} parent=47 // pred_region
          %s1886 = smul.u32 32, %s25
          %s1888 = ssub.s32 4096, 4096
          %1889 = vsyncadd %s1879, %s1888
          %s1890 = smul.addr %s1886, 128
          %s1891 = scalar_lea.hbm %s7, %s1890
          %s1892 = sshll.u32 %s1882, 4
          %s1893 = int_to_ptr.vmem [resolvable:$true] %s1892
          %1898 = dma.vmem_to_hbm [thread:$0]  %s1893, 4096, %s1891, %s1879, 128, 128, 8
        $region64: #{tpu_custom_call.1} parent=47 // pred_fallthru
          _
      $region48: #{tpu_custom_call.1} parent=5 // pred_fallthru
        _
      %p1899 = scmp.le.s32.totalorder 2, %s20
      // Predicated region
      $region65: #{tpu_custom_call.1} parent=5 // pred_check
        %p1900 = pneg %p1899
      $region66: #{tpu_custom_call.1} parent=5 // pred_check_branch
        %1902 = sbr.rel (%p1900) target = $region68
      $region67: #{tpu_custom_call.1} parent=5 // pred_region
        %s1903 = ssub.s32 %s20, 2
        // Predicated region
        $region69: #{tpu_custom_call.1} parent=67 // pred_check
          %p1904 = pneg %p201
        $region70: #{tpu_custom_call.1} parent=67 // pred_check_branch
          %1906 = sbr.rel (%p1904) target = $region72
        $region71: #{tpu_custom_call.1} parent=67 // pred_region
          %s1907 = sand.u32 %s186, 1
          %s1908 = scalar_lea.sflag [#allocation4], %s1907
          %s1909 = sand.u32 %s186, 1
          %s1910 = smul.addr %s1909, 256
          %s1911 = scalar_lea.vmem [#allocation8], %s1910
          %1912 = dma.done %s1908, 4096
        $region72: #{tpu_custom_call.1} parent=67 // pred_fallthru
          _
      $region68: #{tpu_custom_call.1} parent=5 // pred_fallthru
        _
    $region6: #{tpu_custom_call.1} parent=1 // loop_footer
      %s24 = sadd.s32 1, %s20
    $region7: #{tpu_custom_call.1} parent=1 // loop_footer_branch
      %19 = sbr.rel target = $region3
    $region8: #{tpu_custom_call.1} parent=1 // loop_exit
      _
    %1913 = vsyncpa [#allocation3], 1
    %s1914 = scalar_lea.sflag [#allocation3], 1
    %1915 = vsyncpa %s1914, 1
    %1916 = vsyncpa [#allocation6], 1
    %1917 = vsyncpa [#allocation4], 1
    %s1918 = scalar_lea.sflag [#allocation4], 1
    %1919 = vsyncpa %s1918, 1

</llo_original>
